<compile_context>
chip_gen: v5e
topology: v5e:2x2
jax: 0.10.0
libtpu: 0.0.40
codegen_flags: <defaults>
</compile_context>

<pallas_src>
import functools

import numpy as np
import jax
import jax.numpy as jnp
from jax import lax
from jax.experimental import pallas as pl
from jax.experimental.pallas import tpu as pltpu


# ---------------------------------------------------------------------------
# Trace-time constant builders (numpy, float64 -> float32)
# ---------------------------------------------------------------------------

def _hamming_window_periodic(win_length: int) -> np.ndarray:
    # torch.hamming_window(win_length): periodic=True, alpha=0.54, beta=0.46
    n = np.arange(win_length, dtype=np.float64)
    return 0.54 - 0.46 * np.cos(2.0 * np.pi * n / win_length)


def _mel_filterbank(sr, n_fft, n_mels, fmin=0.0, fmax=None) -> np.ndarray:
    """Replicates librosa.filters.mel defaults (Slaney scale, 'slaney' norm)."""
    if fmax is None:
        fmax = sr / 2.0
    f_sp = 200.0 / 3.0
    min_log_hz = 1000.0
    min_log_mel = min_log_hz / f_sp
    logstep = np.log(6.4) / 27.0

    def hz_to_mel(f):
        f = np.asarray(f, dtype=np.float64)
        mels = f / f_sp
        return np.where(f >= min_log_hz,
                        min_log_mel + np.log(np.maximum(f, min_log_hz) / min_log_hz) / logstep,
                        mels)

    def mel_to_hz(m):
        m = np.asarray(m, dtype=np.float64)
        freqs = f_sp * m
        return np.where(m >= min_log_mel,
                        min_log_hz * np.exp(logstep * (m - min_log_mel)),
                        freqs)

    n_freqs = 1 + n_fft // 2
    fftfreqs = np.linspace(0.0, sr / 2.0, n_freqs)
    mel_pts = mel_to_hz(np.linspace(hz_to_mel(fmin), hz_to_mel(fmax), n_mels + 2))
    fdiff = np.diff(mel_pts)
    ramps = mel_pts[:, None] - fftfreqs[None, :]

    weights = np.zeros((n_mels, n_freqs), dtype=np.float64)
    for i in range(n_mels):
        lower = -ramps[i] / fdiff[i]
        upper = ramps[i + 2] / fdiff[i + 1]
        weights[i] = np.maximum(0.0, np.minimum(lower, upper))

    enorm = 2.0 / (mel_pts[2:n_mels + 2] - mel_pts[:n_mels])
    weights *= enorm[:, None]
    return weights.astype(np.float32)


def _fused_dft_matrix_t(n_fft, win_length, n_freq_pad):
    """Fused, transposed windowed real-DFT matrix: (2*FPAD, n_fft).

    Rows [0, n_freq)            : window * cos  (real part)
    Rows [FPAD, FPAD + n_freq)  : window * sin  (imag part, sign irrelevant)
    Padded rows are zero so padded bins produce exactly zero spectra.
    """
    window = _hamming_window_periodic(win_length)
    pad_left = (n_fft - win_length) // 2
    win_full = np.zeros(n_fft, dtype=np.float64)
    win_full[pad_left:pad_left + win_length] = window

    n_freq = n_fft // 2 + 1
    k = np.arange(n_freq, dtype=np.float64)[:, None]
    n = np.arange(n_fft, dtype=np.float64)[None, :]
    ang = 2.0 * np.pi * k * n / n_fft
    wcos = np.cos(ang) * win_full[None, :]                     # (n_freq, n_fft)
    wsin = np.sin(ang) * win_full[None, :]

    wt = np.zeros((2 * n_freq_pad, n_fft), dtype=np.float64)
    wt[:n_freq, :] = wcos
    wt[n_freq_pad:n_freq_pad + n_freq, :] = wsin
    return wt.astype(np.float32)


# ---------------------------------------------------------------------------
# Pallas kernel: windowed DFT + log-magnitude + mel projection + norm stats
# ---------------------------------------------------------------------------

def _melspec_kernel(frames_ref, wt_ref, melb_ref, mel_ref, stats_ref, *,
                    n_frames, tile_frames, n_freq_pad):
    # frames_ref: (n_fft, TNF)  f32  -- frames on the (fast) lane axis
    # wt_ref:     (2*FPAD, n_fft) f32 -- fused [cos; sin] windowed DFT matrix
    # melb_ref:   (n_mels, FPAD) bf16
    # mel_ref:    (n_mels, TNF) f32
    # stats_ref:  (n_mels, 2)   f32  -- per-tile masked [sum, sum of squares]
    ft = frames_ref[...]
    spec = jnp.dot(wt_ref[...], ft,
                   preferred_element_type=jnp.float32)          # (2*FPAD, TNF)
    re = spec[:n_freq_pad]
    im = spec[n_freq_pad:]
    power = re * re + im * im
    # 0.5*log(p + 1e-18) == log(|X| + 1e-9) to far below the test tolerance,
    # and costs one EUP transcendental instead of two (drops the sqrt).
    logmag = 0.5 * jnp.log(power + 1e-18)                        # (FPAD, TNF)

    mel = jnp.dot(melb_ref[...], logmag.astype(jnp.bfloat16),
                  preferred_element_type=jnp.float32)            # (n_mels, TNF)
    mel_ref[...] = mel

    # Per-tile InstanceNorm partial statistics over the *valid* frames only
    # (the frame axis is padded to a multiple of the tile size).
    t = pl.program_id(1)
    valid = jnp.clip(n_frames - t * tile_frames, 0, tile_frames)
    lane = lax.broadcasted_iota(jnp.int32, (1, tile_frames), 1)
    mel_m = jnp.where(lane < valid, mel, 0.0)
    s = jnp.sum(mel_m, axis=1, keepdims=True)                    # (n_mels, 1)
    q = jnp.sum(mel_m * mel_m, axis=1, keepdims=True)            # (n_mels, 1)
    stats_ref[...] = jnp.concatenate([s, q], axis=1)             # (n_mels, 2)


def _const_spec(shape):
    """BlockSpec for grid-invariant operands.

    They are DMA'd once (constant index_map); pl.Buffered(1) removes their
    second pipeline buffer (~1.6 MB of VMEM).  Fall back gracefully if this
    Pallas version does not expose pipeline_mode.
    """
    index_map = lambda b, t: (0, 0)
    try:
        return pl.BlockSpec(shape, index_map, pipeline_mode=pl.Buffered(1))
    except Exception:
        return pl.BlockSpec(shape, index_map)


def _melspec_pallas(frames_t, wt, melb_bf16, *, n_frames, tile_frames):
    B, NFFT, NF_pad = frames_t.shape
    NMELS, FPAD = melb_bf16.shape
    NT = NF_pad // tile_frames

    kernel = functools.partial(_melspec_kernel, n_frames=n_frames,
                               tile_frames=tile_frames, n_freq_pad=FPAD)
    return pl.pallas_call(
        kernel,
        out_shape=(
            jax.ShapeDtypeStruct((B, NMELS, NF_pad), jnp.float32),   # mel
            jax.ShapeDtypeStruct((B, NT, NMELS, 2), jnp.float32),    # stats
        ),
        grid_spec=pltpu.PrefetchScalarGridSpec(
            num_scalar_prefetch=0,
            grid=(B, NT),
            in_specs=[
                pl.BlockSpec((None, NFFT, tile_frames), lambda b, t: (b, 0, t)),
                _const_spec((2 * FPAD, NFFT)),        # fused DFT matrix (f32)
                _const_spec((NMELS, FPAD)),           # mel filterbank (bf16)
            ],
            out_specs=(
                pl.BlockSpec((None, NMELS, tile_frames), lambda b, t: (b, 0, t)),
                pl.BlockSpec((None, None, NMELS, 2), lambda b, t: (b, t, 0, 0)),
            ),
        ),
        compiler_params=pltpu.CompilerParams(
            dimension_semantics=("parallel", "parallel"),
            vmem_limit_bytes=32 * 1024 * 1024),
    )(frames_t, wt, melb_bf16)


# ---------------------------------------------------------------------------
# Jitted forward: pre-emphasis + STFT framing (glue) + Pallas hot path
# ---------------------------------------------------------------------------

@functools.partial(jax.jit, static_argnames=("coef", "n_fft", "hop"))
def mel_spectrogram_forward(x, wt, melb_bf16, *, coef, n_fft, hop):
    B, N = x.shape

    # PreEmphasis: reflect-pad (1, 0) then conv with [-coef, 1.0]
    pad = jnp.concatenate([x[:, 1:2], x], axis=1)
    y = pad[:, 1:] - coef * pad[:, :-1]

    # torch.stft(center=True, pad_mode='reflect') framing
    half = n_fft // 2
    y = jnp.pad(y, ((0, 0), (half, half)), mode="reflect")
    n_frames = 1 + (y.shape[1] - n_fft) // hop

    # Pad the frame axis to a multiple of the time tile (multiple of 128) so
    # all blocks / stores are lane-dense.  Padded frames are masked out of the
    # InstanceNorm statistics inside the kernel and sliced off below.
    if n_frames > 256:
        tnf = 512
    elif n_frames > 128:
        tnf = 256
    else:
        tnf = 128
    nf_pad = ((n_frames + tnf - 1) // tnf) * tnf
    extra = max(0, (nf_pad - 1) * hop + n_fft - y.shape[1])
    if extra:
        y = jnp.pad(y, ((0, 0), (0, extra)))

    # Frame with the frame index on the lane axis: (B, n_fft, NF_pad).
    # TODO(synk): with a bf16 DFT this gather (3.2x HBM expansion) becomes the
    # binding cost; move framing in-kernel (manual DMA) at that point.
    idx = (jnp.arange(n_fft, dtype=jnp.int32)[:, None]
           + hop * jnp.arange(nf_pad, dtype=jnp.int32)[None, :])
    frames_t = jnp.take(y, idx, axis=1)                       # (B, n_fft, NF_pad)

    mel, stats = _melspec_pallas(frames_t, wt, melb_bf16,
                                 n_frames=n_frames, tile_frames=tnf)

    # Two-pass InstanceNorm1d (affine=False, eps=1e-5), finalized on the tiny
    # (B, NT, n_mels, 2) partial-statistics tensor.
    tot = jnp.sum(stats, axis=1)                               # (B, n_mels, 2)
    mean = tot[..., 0] / n_frames
    var = jnp.maximum(tot[..., 1] / n_frames - mean * mean, 0.0)
    rstd = lax.rsqrt(var + 1e-5)
    out = (mel - mean[..., None]) * rstd[..., None]            # (B, n_mels, NF_pad)
    return out[:, None, :, :n_frames]                          # (B, 1, n_mels, NF)


class MelSpectrogramPallas:
    def __init__(self, sample_rate=16000, n_fft=512, win_length=400, hop=160,
                 n_mels=80, coef=0.97):
        self.n_fft = n_fft
        self.win_length = win_length
        self.hop = hop
        self.n_mels = n_mels
        self.coef = coef
        self.n_freq = n_fft // 2 + 1
        # pad freq axis to a multiple of 128 lanes (padded bins are zero-weight)
        self.n_freq_pad = ((self.n_freq + 127) // 128) * 128

        self.wt = jnp.asarray(
            _fused_dft_matrix_t(n_fft, win_length, self.n_freq_pad))

        melb = np.zeros((n_mels, self.n_freq_pad), dtype=np.float32)
        melb[:, :self.n_freq] = _mel_filterbank(sample_rate, n_fft, n_mels)
        self.mel_basis_f32 = melb
        self.melb = jnp.asarray(melb, dtype=jnp.bfloat16)

    def __call__(self, x):
        return mel_spectrogram_forward(x, self.wt, self.melb, coef=self.coef,
                                       n_fft=self.n_fft, hop=self.hop)


# ---------------------------------------------------------------------------
# Pure-numpy (float64, np.fft) reference for correctness checking
# ---------------------------------------------------------------------------

def _reference_numpy(x, *, coef, n_fft, win_length, hop, mel_basis):
    x = np.asarray(x, dtype=np.float64)
    pad = np.concatenate([x[:, 1:2], x], axis=1)
    y = pad[:, 1:] - coef * pad[:, :-1]

    half = n_fft // 2
    y = np.pad(y, ((0, 0), (half, half)), mode="reflect")

    win = _hamming_window_periodic(win_length)
    win_full = np.zeros(n_fft, dtype=np.float64)
    off = (n_fft - win_length) // 2
    win_full[off:off + win_length] = win

    n_frames = 1 + (y.shape[1] - n_fft) // hop
    idx = np.arange(n_frames)[:, None] * hop + np.arange(n_fft)[None, :]
    frames = y[:, idx] * win_full[None, None, :]              # (B, NF, n_fft)

    spec = np.fft.rfft(frames, n=n_fft, axis=-1)              # (B, NF, 257)
    logmag = np.log(np.abs(spec) + 1e-9)
    mel = np.einsum("mf,bnf->bmn", mel_basis.astype(np.float64), logmag)

    mean = mel.mean(axis=-1, keepdims=True)
    var = ((mel - mean) ** 2).mean(axis=-1, keepdims=True)
    out = (mel - mean) / np.sqrt(var + 1e-5)
    return out[:, None, :, :]


if __name__ == "__main__":
    key = jax.random.PRNGKey(0)
    k1, k2 = jax.random.split(key)
    mod = MelSpectrogramPallas()

    # Tolerance note: the DFT runs in f32, the mel projection in bf16 with f32
    # accumulation; after InstanceNorm the worst-case deviation from the f64
    # reference is a few 1e-2 in low-energy mel channels.
    RTOL = ATOL = 5e-2

    # Case 1: small batch (B=2, 0.15 s @ 16 kHz -> 16 frames, one time tile).
    B, N = 2, 2400
    x1 = jax.random.normal(k1, (B, N), dtype=jnp.float32)
    out1 = jax.block_until_ready(mod(x1))
    nf1 = 1 + N // mod.hop
    assert out1.shape == (B, 1, mod.n_mels, nf1), out1.shape
    ref1 = _reference_numpy(np.asarray(x1), coef=mod.coef, n_fft=mod.n_fft,
                            win_length=mod.win_length, hop=mod.hop,
                            mel_basis=mod.mel_basis_f32[:, :mod.n_freq])
    np.testing.assert_allclose(np.asarray(out1), ref1, rtol=RTOL, atol=ATOL)

    # Case 2: single 6 s utterance -> 601 frames, 2 time tiles; exercises the
    # multi-tile grid, padded-frame masking and the two-pass InstanceNorm.
    N2 = 96000
    x2 = jax.random.normal(k2, (1, N2), dtype=jnp.float32)
    out2 = jax.block_until_ready(mod(x2))
    nf2 = 1 + N2 // mod.hop
    assert out2.shape == (1, 1, mod.n_mels, nf2), out2.shape
    ref2 = _reference_numpy(np.asarray(x2), coef=mod.coef, n_fft=mod.n_fft,
                            win_length=mod.win_length, hop=mod.hop,
                            mel_basis=mod.mel_basis_f32[:, :mod.n_freq])
    np.testing.assert_allclose(np.asarray(out2), ref2, rtol=RTOL, atol=ATOL)

    print("KERNEL_OK")
</pallas_src>

<mosaic_0001>
module attributes {stable_mosaic.version = 11 : i64} {
  func.func @_melspec_kernel(%arg0: i32, %arg1: i32, %arg2: memref<1x512x128xf32, #tpu.memory_space<vmem>>, %arg3: memref<768x512xf32, #tpu.memory_space<vmem>>, %arg4: memref<80x384xbf16, #tpu.memory_space<vmem>>, %arg5: memref<1x80x128xf32, #tpu.memory_space<vmem>>, %arg6: memref<1x1x80x2xf32, #tpu.memory_space<vmem>>) attributes {dimension_semantics = [#tpu.dimension_semantics<parallel>, #tpu.dimension_semantics<parallel>], iteration_bounds = array<i64: 2, 1>, scalar_prefetch = 0 : i64, scratch_operands = 0 : i64, tpu.core_type = #tpu.core_type<tc>, window_params = [{transform_indices = @transform_0, window_bounds = array<i64: 1, 512, 128>}, {pipeline_mode = #tpu.pipeline_mode<synchronous>, transform_indices = @transform_1, window_bounds = array<i64: 768, 512>}, {pipeline_mode = #tpu.pipeline_mode<synchronous>, transform_indices = @transform_2, window_bounds = array<i64: 80, 384>}, {transform_indices = @transform_3, window_bounds = array<i64: 1, 80, 128>}, {transform_indices = @transform_4, window_bounds = array<i64: 1, 1, 80, 2>}]} {
    %c0 = arith.constant 0 : index
    %c0_0 = arith.constant 0 : index
    %c0_1 = arith.constant 0 : index
    %0 = vector.load %arg2[%c0, %c0_0, %c0_1] : memref<1x512x128xf32, #tpu.memory_space<vmem>>, vector<1x512x128xf32>
    %1 = vector.shape_cast %0 : vector<1x512x128xf32> to vector<512x128xf32>
    %c0_2 = arith.constant 0 : index
    %c0_3 = arith.constant 0 : index
    %2 = vector.load %arg3[%c0_2, %c0_3] : memref<768x512xf32, #tpu.memory_space<vmem>>, vector<768x512xf32>
    %cst = arith.constant dense<0.000000e+00> : vector<768x128xf32>
    %3 = tpu.matmul %2, %1, %cst {dimension_numbers = #tpu.dot_dimension_numbers<[1], [0], [0], [1], [0, 0, 1, 1], [], []>} : vector<768x512xf32>, vector<512x128xf32>, vector<768x128xf32> -> vector<768x128xf32>
    %4 = vector.extract_strided_slice %3 {offsets = [0, 0], sizes = [384, 128], strides = [1, 1]} : vector<768x128xf32> to vector<384x128xf32>
    %5 = vector.extract_strided_slice %3 {offsets = [384, 0], sizes = [384, 128], strides = [1, 1]} : vector<768x128xf32> to vector<384x128xf32>
    %6 = arith.mulf %4, %4 : vector<384x128xf32>
    %7 = arith.mulf %5, %5 : vector<384x128xf32>
    %8 = arith.addf %6, %7 : vector<384x128xf32>
    %cst_4 = arith.constant 1.000000e-18 : f32
    %9 = vector.broadcast %cst_4 : f32 to vector<384x128xf32>
    %10 = arith.addf %8, %9 : vector<384x128xf32>
    %11 = math.log %10 : vector<384x128xf32>
    %cst_5 = arith.constant 5.000000e-01 : f32
    %12 = vector.broadcast %cst_5 : f32 to vector<384x128xf32>
    %13 = arith.mulf %12, %11 : vector<384x128xf32>
    %c0_6 = arith.constant 0 : index
    %c0_7 = arith.constant 0 : index
    %14 = vector.load %arg4[%c0_6, %c0_7] : memref<80x384xbf16, #tpu.memory_space<vmem>>, vector<80x384xbf16>
    %15 = arith.truncf %13 : vector<384x128xf32> to vector<384x128xbf16>
    %cst_8 = arith.constant dense<0.000000e+00> : vector<80x128xf32>
    %16 = tpu.matmul %14, %15, %cst_8 {dimension_numbers = #tpu.dot_dimension_numbers<[1], [0], [0], [1], [0, 0, 1, 1], [], []>} : vector<80x384xbf16>, vector<384x128xbf16>, vector<80x128xf32> -> vector<80x128xf32>
    %c0_9 = arith.constant 0 : index
    %c0_10 = arith.constant 0 : index
    %c0_11 = arith.constant 0 : index
    %17 = vector.load %arg5[%c0_9, %c0_10, %c0_11] : memref<1x80x128xf32, #tpu.memory_space<vmem>>, vector<1x80x128xf32>
    %18 = vector.shape_cast %17 : vector<1x80x128xf32> to vector<80x128xf32>
    %19 = vector.shape_cast %16 : vector<80x128xf32> to vector<1x80x128xf32>
    tpu.vector_store %arg5[%c0_9, %c0_10, %c0_11], %19 {strides = array<i32>} : memref<1x80x128xf32, #tpu.memory_space<vmem>>, vector<1x80x128xf32>,
    %c128_i32 = arith.constant 128 : i32
    %20 = arith.muli %arg1, %c128_i32 : i32
    %c16_i32 = arith.constant 16 : i32
    %21 = arith.subi %c16_i32, %20 : i32
    %c0_i32 = arith.constant 0 : i32
    %c128_i32_12 = arith.constant 128 : i32
    %22 = arith.maxsi %c0_i32, %21 : i32
    %23 = arith.minsi %c128_i32_12, %22 : i32
    %24 = tpu.iota {dimensions = array<i32: 1>} : vector<1x128xi32>
    %25 = vector.broadcast %23 : i32 to vector<1x128xi32>
    %26 = arith.cmpi slt, %24, %25 : vector<1x128xi32>
    %cst_13 = arith.constant 0.000000e+00 : f32
    %27 = vector.shape_cast %26 : vector<1x128xi1> to vector<1x128xi1>
    %28 = vector.broadcast %27 : vector<1x128xi1> to vector<80x128xi1>
    %29 = vector.broadcast %cst_13 : f32 to vector<80x128xf32>
    %30 = arith.select %28, %16, %29 : vector<80x128xi1>, vector<80x128xf32>
    %cst_14 = arith.constant dense<0.000000e+00> : vector<80xf32>
    %31 = vector.multi_reduction <add>, %30, %cst_14 [1] : vector<80x128xf32> to vector<80xf32>
    %32 = vector.shape_cast %31 : vector<80xf32> to vector<80x1xf32>
    %33 = arith.mulf %30, %30 : vector<80x128xf32>
    %cst_15 = arith.constant dense<0.000000e+00> : vector<80xf32>
    %34 = vector.multi_reduction <add>, %33, %cst_15 [1] : vector<80x128xf32> to vector<80xf32>
    %35 = vector.shape_cast %34 : vector<80xf32> to vector<80x1xf32>
    %36 = tpu.concatenate %32, %35 in 1 : vector<80x1xf32>, vector<80x1xf32> -> vector<80x2xf32>
    %c0_16 = arith.constant 0 : index
    %c0_17 = arith.constant 0 : index
    %c0_18 = arith.constant 0 : index
    %c0_19 = arith.constant 0 : index
    %37 = vector.load %arg6[%c0_16, %c0_17, %c0_18, %c0_19] : memref<1x1x80x2xf32, #tpu.memory_space<vmem>>, vector<1x1x80x2xf32>
    %38 = vector.shape_cast %37 : vector<1x1x80x2xf32> to vector<80x2xf32>
    %39 = vector.shape_cast %36 : vector<80x2xf32> to vector<1x1x80x2xf32>
    tpu.vector_store %arg6[%c0_16, %c0_17, %c0_18, %c0_19], %39 {strides = array<i32>} : memref<1x1x80x2xf32, #tpu.memory_space<vmem>>, vector<1x1x80x2xf32>,
    return
  }
  func.func @transform_0(%arg0: i32, %arg1: i32) -> (i32, i32, i32) {
    %c0_i32 = arith.constant 0 : i32
    %c0_i32_0 = arith.constant 0 : i32
    return %arg0, %c0_i32, %arg1 : i32, i32, i32
  }
  func.func @transform_1(%arg0: i32, %arg1: i32) -> (i32, i32) {
    %c0_i32 = arith.constant 0 : i32
    %c0_i32_0 = arith.constant 0 : i32
    %c0_i32_1 = arith.constant 0 : i32
    return %c0_i32, %c0_i32_0 : i32, i32
  }
  func.func @transform_2(%arg0: i32, %arg1: i32) -> (i32, i32) {
    %c0_i32 = arith.constant 0 : i32
    %c0_i32_0 = arith.constant 0 : i32
    %c0_i32_1 = arith.constant 0 : i32
    return %c0_i32, %c0_i32_0 : i32, i32
  }
  func.func @transform_3(%arg0: i32, %arg1: i32) -> (i32, i32, i32) {
    %c0_i32 = arith.constant 0 : i32
    %c0_i32_0 = arith.constant 0 : i32
    return %arg0, %c0_i32, %arg1 : i32, i32, i32
  }
  func.func @transform_4(%arg0: i32, %arg1: i32) -> (i32, i32, i32, i32) {
    %c0_i32 = arith.constant 0 : i32
    %c0_i32_0 = arith.constant 0 : i32
    %c0_i32_1 = arith.constant 0 : i32
    return %arg0, %arg1, %c0_i32, %c0_i32_0 : i32, i32, i32, i32
  }
}

</mosaic_0001>

<llo_original>
// kernel: mel_spectrogram_forward.1
$region0: #{mel_spectrogram_forward.1}
  #allocation0 [shape = 'u32[]', space=smem, size = 0x4, offset = 0x4, fixed_abs, tag = 'smem constant byte address 0x4 - core index']
  #allocation1 [shape = 'u32[72,128]{1,0:T(1,128)}', space=vmem, size = 0x9000, scoped, tag = 'internal scratch']
  %s0 = inlined_call_operand.vmem [shape: f32[2,512,128], index: 0, kind: input, shape index: {}]
  %s1 = inlined_call_operand.vmem [shape: f32[768,512], index: 1, kind: input, shape index: {}]
  %s2 = inlined_call_operand.vmem [shape: bf16[80,384], index: 2, kind: input, shape index: {}]
  %s3 = inlined_call_operand.vmem [shape: f32[2,80,128], index: 3, kind: output, shape index: {0}]
  %s4 = inlined_call_operand.vmem [shape: f32[2,1,80,2], index: 4, kind: output, shape index: {1}]
  %5 = xla_tuple %s3, %s4
  %s6 = sld [smem:[#allocation0]]
  $region53: #{mel_spectrogram_forward.1} parent=0
    _
  %s8 = ssub.s32 1, %s6
  %s9 = scalar_select 0, %s8, %s6
  loop: start=0, step=1, limit=4
  $region2: #{mel_spectrogram_forward.1} parent=0 // loop_pre_header
    _
  $region3: #{mel_spectrogram_forward.1} parent=0 // loop_header
    %s11 = sphi 0, %s15
    %p12 = scmp.ge.s32.totalorder %s11, 4
    %s18 = sphi 0, %s30
    %s19 = sphi 0, %s26
    %s20 = sphi 0, %s18
    %s21 = sphi 0, %s19
    %s22 = sphi 0, %s20
    %s23 = sphi 0, %s21
    %s35 = sphi 0, %s37
    %s38 = sphi 0, %s35
    %s39 = sphi 0, %s38
    %s55 = sphi 0, %s39
    %s59 = sphi 0, %s59
    %s61 = sphi 0, %s59
    %s62 = sphi 0, %s61
    %s76 = sphi 0, %s62
    %s80 = sphi 0, %s80
    %s82 = sphi 0, %s80
    %s83 = sphi 0, %s82
    %s97 = sphi 0, %s83
    %s105 = sphi 0, %s107
    %s108 = sphi 0, %s105
    %s109 = sphi 0, %s108
    %s125 = sphi 0, %s109
    %s133 = sphi 0, %s135
    %s136 = sphi 0, %s133
    %s137 = sphi 0, %s136
    %s153 = sphi 0, %s137
  $region4: #{mel_spectrogram_forward.1} parent=0 // loop_header_branch
    %14 = sbr.rel (%p12) target = $region8
  $region5: #{mel_spectrogram_forward.1} parent=0 // loop_body
    %s16 = ssub.s32 %s11, 1
    %s17 = ssub.s32 %s11, 2
    %s24 = sadd.s32 1, %s19
    %p25 = scmp.ge.s32.totalorder %s24, 1
    %s26 = scalar_select %p25, 0, %s24
    %s27 = sadd.s32 1, %s18
    %s28 = scalar_select %p25, %s27, %s18
    %p29 = scmp.ge.s32.totalorder %s28, 2
    %s30 = scalar_select %p29, 0, %s28
    %s31 = ssub.s32 %s18, %s30
    %s32 = ssub.s32 %s19, %s26
    %s33 = sor.u32 %s31, %s32
    %p34 = scmp.eq.s32.totalorder %s33, 0
    %s36 = sadd.s32 %s35, 1
    %s37 = scalar_select %p34, %s35, %s36
    %p40 = pneg %p34
    %p41 = scmp.eq.s32.totalorder %s11, 1
    %p42 = por %p40, %p41
    %p43 = scmp.ne.s32.totalorder %s35, %s38
    %p44 = scmp.eq.s32.totalorder %s11, 0
    %p45 = por %p43, %p44
    %p46 = scmp.ne.s32.totalorder %s35, %s38
    %p47 = scmp.eq.s32.totalorder %s16, 1
    %p48 = por %p46, %p47
    %p49 = scmp.ne.s32.totalorder %s38, %s39
    %p50 = scmp.eq.s32.totalorder %s16, 0
    %p51 = por %p49, %p50
    %p52 = scmp.ne.s32.totalorder %s38, %s39
    %p53 = scmp.eq.s32.totalorder %s17, 1
    %p54 = por %p52, %p53
    %p56 = scmp.ne.s32.totalorder %s39, %s55
    %p57 = scmp.eq.s32.totalorder %s17, 0
    %p58 = por %p56, %p57
    %s60 = sadd.s32 %s59, 1
    %p63 = scmp.eq.s32.totalorder %s11, 1
    %p64 = scmp.ne.s32.totalorder %s59, %s61
    %p65 = scmp.eq.s32.totalorder %s11, 0
    %p66 = por %p64, %p65
    %p67 = scmp.ne.s32.totalorder %s59, %s61
    %p68 = scmp.eq.s32.totalorder %s16, 1
    %p69 = por %p67, %p68
    %p70 = scmp.ne.s32.totalorder %s61, %s62
    %p71 = scmp.eq.s32.totalorder %s16, 0
    %p72 = por %p70, %p71
    %p73 = scmp.ne.s32.totalorder %s61, %s62
    %p74 = scmp.eq.s32.totalorder %s17, 1
    %p75 = por %p73, %p74
    %p77 = scmp.ne.s32.totalorder %s62, %s76
    %p78 = scmp.eq.s32.totalorder %s17, 0
    %p79 = por %p77, %p78
    %s81 = sadd.s32 %s80, 1
    %p84 = scmp.eq.s32.totalorder %s11, 1
    %p85 = scmp.ne.s32.totalorder %s80, %s82
    %p86 = scmp.eq.s32.totalorder %s11, 0
    %p87 = por %p85, %p86
    %p88 = scmp.ne.s32.totalorder %s80, %s82
    %p89 = scmp.eq.s32.totalorder %s16, 1
    %p90 = por %p88, %p89
    %p91 = scmp.ne.s32.totalorder %s82, %s83
    %p92 = scmp.eq.s32.totalorder %s16, 0
    %p93 = por %p91, %p92
    %p94 = scmp.ne.s32.totalorder %s82, %s83
    %p95 = scmp.eq.s32.totalorder %s17, 1
    %p96 = por %p94, %p95
    %p98 = scmp.ne.s32.totalorder %s83, %s97
    %p99 = scmp.eq.s32.totalorder %s17, 0
    %p100 = por %p98, %p99
    %s101 = ssub.s32 %s18, %s30
    %s102 = ssub.s32 %s19, %s26
    %s103 = sor.u32 %s101, %s102
    %p104 = scmp.eq.s32.totalorder %s103, 0
    %s106 = sadd.s32 %s105, 1
    %s107 = scalar_select %p104, %s105, %s106
    %p110 = pneg %p104
    %p111 = scmp.eq.s32.totalorder %s11, 1
    %p112 = por %p110, %p111
    %p113 = scmp.ne.s32.totalorder %s105, %s108
    %p114 = scmp.eq.s32.totalorder %s11, 0
    %p115 = por %p113, %p114
    %p116 = scmp.ne.s32.totalorder %s105, %s108
    %p117 = scmp.eq.s32.totalorder %s16, 1
    %p118 = por %p116, %p117
    %p119 = scmp.ne.s32.totalorder %s108, %s109
    %p120 = scmp.eq.s32.totalorder %s16, 0
    %p121 = por %p119, %p120
    %p122 = scmp.ne.s32.totalorder %s108, %s109
    %p123 = scmp.eq.s32.totalorder %s17, 1
    %p124 = por %p122, %p123
    %p126 = scmp.ne.s32.totalorder %s109, %s125
    %p127 = scmp.eq.s32.totalorder %s17, 0
    %p128 = por %p126, %p127
    %s129 = ssub.s32 %s18, %s30
    %s130 = ssub.s32 %s19, %s26
    %s131 = sor.u32 %s129, %s130
    %p132 = scmp.eq.s32.totalorder %s131, 0
    %s134 = sadd.s32 %s133, 1
    %s135 = scalar_select %p132, %s133, %s134
    %p138 = pneg %p132
    %p139 = scmp.eq.s32.totalorder %s11, 1
    %p140 = por %p138, %p139
    %p141 = scmp.ne.s32.totalorder %s133, %s136
    %p142 = scmp.eq.s32.totalorder %s11, 0
    %p143 = por %p141, %p142
    %p144 = scmp.ne.s32.totalorder %s133, %s136
    %p145 = scmp.eq.s32.totalorder %s16, 1
    %p146 = por %p144, %p145
    %p147 = scmp.ne.s32.totalorder %s136, %s137
    %p148 = scmp.eq.s32.totalorder %s16, 0
    %p149 = por %p147, %p148
    %p150 = scmp.ne.s32.totalorder %s136, %s137
    %p151 = scmp.eq.s32.totalorder %s17, 1
    %p152 = por %p150, %p151
    %p154 = scmp.ne.s32.totalorder %s137, %s153
    %p155 = scmp.eq.s32.totalorder %s17, 0
    %p156 = por %p154, %p155
    %p157 = scmp.le.s32.totalorder 1, %s11
    %p158 = scmp.lt.s32.totalorder %s11, 3
    %p159 = pnand %p157, %p158
    %p160 = pneg %p159
    // Predicated region
    $region9: #{mel_spectrogram_forward.1} parent=5 // pred_check
      _
    $region10: #{mel_spectrogram_forward.1} parent=5 // pred_check_branch
      %162 = sbr.rel (%p159) target = $region12
    $region11: #{mel_spectrogram_forward.1} parent=5 // pred_region
      %s163 = ssub.s32 %s11, 1
      // Predicated region
      $region13: #{mel_spectrogram_forward.1} parent=11 // pred_check
        %p164 = pneg %p72
      $region14: #{mel_spectrogram_forward.1} parent=11 // pred_check_branch
        %166 = sbr.rel (%p164) target = $region16
      $region15: #{mel_spectrogram_forward.1} parent=11 // pred_region
        _
      $region16: #{mel_spectrogram_forward.1} parent=11 // pred_fallthru
        _
      // Predicated region
      $region17: #{mel_spectrogram_forward.1} parent=11 // pred_check
        %p167 = pneg %p93
      $region18: #{mel_spectrogram_forward.1} parent=11 // pred_check_branch
        %169 = sbr.rel (%p167) target = $region20
      $region19: #{mel_spectrogram_forward.1} parent=11 // pred_region
        _
      $region20: #{mel_spectrogram_forward.1} parent=11 // pred_fallthru
        _
    $region12: #{mel_spectrogram_forward.1} parent=5 // pred_fallthru
      _
    %p170 = scmp.lt.s32.totalorder %s11, 2
    // Predicated region
    $region21: #{mel_spectrogram_forward.1} parent=5 // pred_check
      %p171 = pneg %p170
    $region22: #{mel_spectrogram_forward.1} parent=5 // pred_check_branch
      %173 = sbr.rel (%p171) target = $region24
    $region23: #{mel_spectrogram_forward.1} parent=5 // pred_region
      // Predicated region
      $region25: #{mel_spectrogram_forward.1} parent=23 // pred_check
        %p174 = pneg %p45
      $region26: #{mel_spectrogram_forward.1} parent=23 // pred_check_branch
        %176 = sbr.rel (%p174) target = $region28
      $region27: #{mel_spectrogram_forward.1} parent=23 // pred_region
        %p177 = scmp.lt.s32.totalorder %s18, 1
        %s178 = scalar_select %p177, %s18, 1
        %p179 = scmp.lt.s32.totalorder %s19, 0
        %s180 = scalar_select %p179, %s19, 0
        %s181 = smul.addr %s178, 64
        %s182 = sadd.s32 %s180, %s181
        %s183 = smul.addr %s182, 8
        %s184 = scalar_lea.vmem %s0, %s183
      $region28: #{mel_spectrogram_forward.1} parent=23 // pred_fallthru
        _
    $region24: #{mel_spectrogram_forward.1} parent=5 // pred_fallthru
      _
    %p185 = scmp.le.s32.totalorder 1, %s11
    %p186 = scmp.lt.s32.totalorder %s11, 3
    %p187 = pnand %p185, %p186
    %p188 = pneg %p187
    // Predicated region
    $region29: #{mel_spectrogram_forward.1} parent=5 // pred_check
      _
    $region30: #{mel_spectrogram_forward.1} parent=5 // pred_check_branch
      %190 = sbr.rel (%p187) target = $region32
    $region31: #{mel_spectrogram_forward.1} parent=5 // pred_region
      %s191 = ssub.s32 %s11, 1
      %p192 = scmp.lt.s32.totalorder %s20, 1
      %s193 = scalar_select %p192, %s20, 1
      %p194 = scmp.lt.s32.totalorder %s21, 0
      %s195 = scalar_select %p194, %s21, 0
      %s196 = smul.addr %s193, 64
      %s197 = sadd.s32 %s195, %s196
      %s198 = smul.addr %s197, 8
      %s199 = scalar_lea.vmem %s0, %s198
      %p200 = pneg %p51
      %p201 = pneg %p48
      %p202 = pneg %p72
      %p203 = pneg %p69
      %p204 = pneg %p93
      %p205 = pneg %p90
      %p206 = pneg %p121
      %p207 = pneg %p118
      %p208 = scmp.lt.s32.totalorder %s20, 1
      %s209 = scalar_select %p208, %s20, 1
      %p210 = scmp.lt.s32.totalorder %s21, 0
      %s211 = scalar_select %p210, %s21, 0
      %s212 = smul.addr %s209, 10
      %s213 = sadd.s32 %s211, %s212
      %s214 = smul.addr %s213, 8
      %s215 = scalar_lea.vmem %s3, %s214
      %p216 = pneg %p149
      %p217 = pneg %p146
      %p218 = scmp.lt.s32.totalorder %s20, 1
      %s219 = scalar_select %p218, %s20, 1
      %p220 = scmp.lt.s32.totalorder %s21, 0
      %s221 = scalar_select %p220, %s21, 0
      %s222 = smul.addr %s221, 10
      %s223 = smul.addr %s219, 10
      %s224 = sadd.s32 %s222, %s223
      %s225 = smul.addr %s224, 8
      %s226 = scalar_lea.vmem %s4, %s225
      %p227 = scmp.lt.s32.totalorder %s20, 1
      %s228 = scalar_select %p227, %s20, 1
      %p229 = scmp.lt.s32.totalorder %s21, 0
      %s230 = scalar_select %p229, %s21, 0
      %s231 = smul.addr %s228, 64
      %s232 = sadd.s32 %s230, %s231
      %s233 = smul.addr %s232, 8
      %s234 = scalar_lea.vmem %s0, %s233
      %p235 = scmp.lt.s32.totalorder %s20, 1
      %s236 = scalar_select %p235, %s20, 1
      %p237 = scmp.lt.s32.totalorder %s21, 0
      %s238 = scalar_select %p237, %s21, 0
      %s239 = smul.addr %s236, 10
      %s240 = sadd.s32 %s238, %s239
      %s241 = smul.addr %s240, 8
      %s242 = scalar_lea.vmem %s3, %s241
      %p243 = scmp.lt.s32.totalorder %s20, 1
      %s244 = scalar_select %p243, %s20, 1
      %p245 = scmp.lt.s32.totalorder %s21, 0
      %s246 = scalar_select %p245, %s21, 0
      %s247 = smul.addr %s246, 10
      %s248 = smul.addr %s244, 10
      %s249 = sadd.s32 %s247, %s248
      %s250 = smul.addr %s249, 8
      %s251 = scalar_lea.vmem %s4, %s250
      %v252 = vld [vmem:[%s234] sm:$0xff]
      %v253 = vld [vmem:[%s234 + $0x8] sm:$0xff]
      %v254 = vld [vmem:[%s234 + $0x10] sm:$0xff]
      %v255 = vld [vmem:[%s234 + $0x18] sm:$0xff]
      %v256 = vld [vmem:[%s234 + $0x20] sm:$0xff]
      %v257 = vld [vmem:[%s234 + $0x28] sm:$0xff]
      %v258 = vld [vmem:[%s234 + $0x30] sm:$0xff]
      %v259 = vld [vmem:[%s234 + $0x38] sm:$0xff]
      %v260 = vld [vmem:[%s234 + $0x40] sm:$0xff]
      %v261 = vld [vmem:[%s234 + $0x48] sm:$0xff]
      %v262 = vld [vmem:[%s234 + $0x50] sm:$0xff]
      %v263 = vld [vmem:[%s234 + $0x58] sm:$0xff]
      %v264 = vld [vmem:[%s234 + $0x60] sm:$0xff]
      %v265 = vld [vmem:[%s234 + $0x68] sm:$0xff]
      %v266 = vld [vmem:[%s234 + $0x70] sm:$0xff]
      %v267 = vld [vmem:[%s234 + $0x78] sm:$0xff]
      %v268 = vld [vmem:[%s234 + $0x80] sm:$0xff]
      %v269 = vld [vmem:[%s234 + $0x88] sm:$0xff]
      %v270 = vld [vmem:[%s234 + $0x90] sm:$0xff]
      %v271 = vld [vmem:[%s234 + $0x98] sm:$0xff]
      %v272 = vld [vmem:[%s234 + $0xa0] sm:$0xff]
      %v273 = vld [vmem:[%s234 + $0xa8] sm:$0xff]
      %v274 = vld [vmem:[%s234 + $0xb0] sm:$0xff]
      %v275 = vld [vmem:[%s234 + $0xb8] sm:$0xff]
      %v276 = vld [vmem:[%s234 + $0xc0] sm:$0xff]
      %v277 = vld [vmem:[%s234 + $0xc8] sm:$0xff]
      %v278 = vld [vmem:[%s234 + $0xd0] sm:$0xff]
      %v279 = vld [vmem:[%s234 + $0xd8] sm:$0xff]
      %v280 = vld [vmem:[%s234 + $0xe0] sm:$0xff]
      %v281 = vld [vmem:[%s234 + $0xe8] sm:$0xff]
      %v282 = vld [vmem:[%s234 + $0xf0] sm:$0xff]
      %v283 = vld [vmem:[%s234 + $0xf8] sm:$0xff]
      %v284 = vld [vmem:[%s234 + $0x100] sm:$0xff]
      %v285 = vld [vmem:[%s234 + $0x108] sm:$0xff]
      %v286 = vld [vmem:[%s234 + $0x110] sm:$0xff]
      %v287 = vld [vmem:[%s234 + $0x118] sm:$0xff]
      %v288 = vld [vmem:[%s234 + $0x120] sm:$0xff]
      %v289 = vld [vmem:[%s234 + $0x128] sm:$0xff]
      %v290 = vld [vmem:[%s234 + $0x130] sm:$0xff]
      %v291 = vld [vmem:[%s234 + $0x138] sm:$0xff]
      %v292 = vld [vmem:[%s234 + $0x140] sm:$0xff]
      %v293 = vld [vmem:[%s234 + $0x148] sm:$0xff]
      %v294 = vld [vmem:[%s234 + $0x150] sm:$0xff]
      %v295 = vld [vmem:[%s234 + $0x158] sm:$0xff]
      %v296 = vld [vmem:[%s234 + $0x160] sm:$0xff]
      %v297 = vld [vmem:[%s234 + $0x168] sm:$0xff]
      %v298 = vld [vmem:[%s234 + $0x170] sm:$0xff]
      %v299 = vld [vmem:[%s234 + $0x178] sm:$0xff]
      %v300 = vld [vmem:[%s234 + $0x180] sm:$0xff]
      %v301 = vld [vmem:[%s234 + $0x188] sm:$0xff]
      %v302 = vld [vmem:[%s234 + $0x190] sm:$0xff]
      %v303 = vld [vmem:[%s234 + $0x198] sm:$0xff]
      %v304 = vld [vmem:[%s234 + $0x1a0] sm:$0xff]
      %v305 = vld [vmem:[%s234 + $0x1a8] sm:$0xff]
      %v306 = vld [vmem:[%s234 + $0x1b0] sm:$0xff]
      %v307 = vld [vmem:[%s234 + $0x1b8] sm:$0xff]
      %v308 = vld [vmem:[%s234 + $0x1c0] sm:$0xff]
      %v309 = vld [vmem:[%s234 + $0x1c8] sm:$0xff]
      %v310 = vld [vmem:[%s234 + $0x1d0] sm:$0xff]
      %v311 = vld [vmem:[%s234 + $0x1d8] sm:$0xff]
      %v312 = vld [vmem:[%s234 + $0x1e0] sm:$0xff]
      %v313 = vld [vmem:[%s234 + $0x1e8] sm:$0xff]
      %v314 = vld [vmem:[%s234 + $0x1f0] sm:$0xff]
      %v315 = vld [vmem:[%s234 + $0x1f8] sm:$0xff]
      %v316 = vld [vmem:[%s1] sm:$0xff]
      %v317 = vld [vmem:[%s1 + $0x8] sm:$0xff]
      %v318 = vld [vmem:[%s1 + $0x10] sm:$0xff]
      %v319 = vld [vmem:[%s1 + $0x18] sm:$0xff]
      %v320 = vld [vmem:[%s1 + $0x20] sm:$0xff]
      %v321 = vld [vmem:[%s1 + $0x28] sm:$0xff]
      %v322 = vld [vmem:[%s1 + $0x30] sm:$0xff]
      %v323 = vld [vmem:[%s1 + $0x38] sm:$0xff]
      %v324 = vld [vmem:[%s1 + $0x40] sm:$0xff]
      %v325 = vld [vmem:[%s1 + $0x48] sm:$0xff]
      %v326 = vld [vmem:[%s1 + $0x50] sm:$0xff]
      %v327 = vld [vmem:[%s1 + $0x58] sm:$0xff]
      %v328 = vld [vmem:[%s1 + $0x60] sm:$0xff]
      %v329 = vld [vmem:[%s1 + $0x68] sm:$0xff]
      %v330 = vld [vmem:[%s1 + $0x70] sm:$0xff]
      %v331 = vld [vmem:[%s1 + $0x78] sm:$0xff]
      %v332 = vld [vmem:[%s1 + $0x80] sm:$0xff]
      %v333 = vld [vmem:[%s1 + $0x88] sm:$0xff]
      %v334 = vld [vmem:[%s1 + $0x90] sm:$0xff]
      %v335 = vld [vmem:[%s1 + $0x98] sm:$0xff]
      %v336 = vld [vmem:[%s1 + $0xa0] sm:$0xff]
      %v337 = vld [vmem:[%s1 + $0xa8] sm:$0xff]
      %v338 = vld [vmem:[%s1 + $0xb0] sm:$0xff]
      %v339 = vld [vmem:[%s1 + $0xb8] sm:$0xff]
      %v340 = vld [vmem:[%s1 + $0xc0] sm:$0xff]
      %v341 = vld [vmem:[%s1 + $0xc8] sm:$0xff]
      %v342 = vld [vmem:[%s1 + $0xd0] sm:$0xff]
      %v343 = vld [vmem:[%s1 + $0xd8] sm:$0xff]
      %v344 = vld [vmem:[%s1 + $0xe0] sm:$0xff]
      %v345 = vld [vmem:[%s1 + $0xe8] sm:$0xff]
      %v346 = vld [vmem:[%s1 + $0xf0] sm:$0xff]
      %v347 = vld [vmem:[%s1 + $0xf8] sm:$0xff]
      %v348 = vld [vmem:[%s1 + $0x100] sm:$0xff]
      %v349 = vld [vmem:[%s1 + $0x108] sm:$0xff]
      %v350 = vld [vmem:[%s1 + $0x110] sm:$0xff]
      %v351 = vld [vmem:[%s1 + $0x118] sm:$0xff]
      %v352 = vld [vmem:[%s1 + $0x120] sm:$0xff]
      %v353 = vld [vmem:[%s1 + $0x128] sm:$0xff]
      %v354 = vld [vmem:[%s1 + $0x130] sm:$0xff]
      %v355 = vld [vmem:[%s1 + $0x138] sm:$0xff]
      %v356 = vld [vmem:[%s1 + $0x140] sm:$0xff]
      %v357 = vld [vmem:[%s1 + $0x148] sm:$0xff]
      %v358 = vld [vmem:[%s1 + $0x150] sm:$0xff]
      %v359 = vld [vmem:[%s1 + $0x158] sm:$0xff]
      %v360 = vld [vmem:[%s1 + $0x160] sm:$0xff]
      %v361 = vld [vmem:[%s1 + $0x168] sm:$0xff]
      %v362 = vld [vmem:[%s1 + $0x170] sm:$0xff]
      %v363 = vld [vmem:[%s1 + $0x178] sm:$0xff]
      %v364 = vld [vmem:[%s1 + $0x180] sm:$0xff]
      %v365 = vld [vmem:[%s1 + $0x188] sm:$0xff]
      %v366 = vld [vmem:[%s1 + $0x190] sm:$0xff]
      %v367 = vld [vmem:[%s1 + $0x198] sm:$0xff]
      %v368 = vld [vmem:[%s1 + $0x1a0] sm:$0xff]
      %v369 = vld [vmem:[%s1 + $0x1a8] sm:$0xff]
      %v370 = vld [vmem:[%s1 + $0x1b0] sm:$0xff]
      %v371 = vld [vmem:[%s1 + $0x1b8] sm:$0xff]
      %v372 = vld [vmem:[%s1 + $0x1c0] sm:$0xff]
      %v373 = vld [vmem:[%s1 + $0x1c8] sm:$0xff]
      %v374 = vld [vmem:[%s1 + $0x1d0] sm:$0xff]
      %v375 = vld [vmem:[%s1 + $0x1d8] sm:$0xff]
      %v376 = vld [vmem:[%s1 + $0x1e0] sm:$0xff]
      %v377 = vld [vmem:[%s1 + $0x1e8] sm:$0xff]
      %v378 = vld [vmem:[%s1 + $0x1f0] sm:$0xff]
      %v379 = vld [vmem:[%s1 + $0x1f8] sm:$0xff]
      %v380 = vld [vmem:[%s1 + $0x200] sm:$0xff]
      %v381 = vld [vmem:[%s1 + $0x208] sm:$0xff]
      %v382 = vld [vmem:[%s1 + $0x210] sm:$0xff]
      %v383 = vld [vmem:[%s1 + $0x218] sm:$0xff]
      %v384 = vld [vmem:[%s1 + $0x220] sm:$0xff]
      %v385 = vld [vmem:[%s1 + $0x228] sm:$0xff]
      %v386 = vld [vmem:[%s1 + $0x230] sm:$0xff]
      %v387 = vld [vmem:[%s1 + $0x238] sm:$0xff]
      %v388 = vld [vmem:[%s1 + $0x240] sm:$0xff]
      %v389 = vld [vmem:[%s1 + $0x248] sm:$0xff]
      %v390 = vld [vmem:[%s1 + $0x250] sm:$0xff]
      %v391 = vld [vmem:[%s1 + $0x258] sm:$0xff]
      %v392 = vld [vmem:[%s1 + $0x260] sm:$0xff]
      %v393 = vld [vmem:[%s1 + $0x268] sm:$0xff]
      %v394 = vld [vmem:[%s1 + $0x270] sm:$0xff]
      %v395 = vld [vmem:[%s1 + $0x278] sm:$0xff]
      %v396 = vld [vmem:[%s1 + $0x280] sm:$0xff]
      %v397 = vld [vmem:[%s1 + $0x288] sm:$0xff]
      %v398 = vld [vmem:[%s1 + $0x290] sm:$0xff]
      %v399 = vld [vmem:[%s1 + $0x298] sm:$0xff]
      %v400 = vld [vmem:[%s1 + $0x2a0] sm:$0xff]
      %v401 = vld [vmem:[%s1 + $0x2a8] sm:$0xff]
      %v402 = vld [vmem:[%s1 + $0x2b0] sm:$0xff]
      %v403 = vld [vmem:[%s1 + $0x2b8] sm:$0xff]
      %v404 = vld [vmem:[%s1 + $0x2c0] sm:$0xff]
      %v405 = vld [vmem:[%s1 + $0x2c8] sm:$0xff]
      %v406 = vld [vmem:[%s1 + $0x2d0] sm:$0xff]
      %v407 = vld [vmem:[%s1 + $0x2d8] sm:$0xff]
      %v408 = vld [vmem:[%s1 + $0x2e0] sm:$0xff]
      %v409 = vld [vmem:[%s1 + $0x2e8] sm:$0xff]
      %v410 = vld [vmem:[%s1 + $0x2f0] sm:$0xff]
      %v411 = vld [vmem:[%s1 + $0x2f8] sm:$0xff]
      %v412 = vld [vmem:[%s1 + $0x300] sm:$0xff]
      %v413 = vld [vmem:[%s1 + $0x308] sm:$0xff]
      %v414 = vld [vmem:[%s1 + $0x310] sm:$0xff]
      %v415 = vld [vmem:[%s1 + $0x318] sm:$0xff]
      %v416 = vld [vmem:[%s1 + $0x320] sm:$0xff]
      %v417 = vld [vmem:[%s1 + $0x328] sm:$0xff]
      %v418 = vld [vmem:[%s1 + $0x330] sm:$0xff]
      %v419 = vld [vmem:[%s1 + $0x338] sm:$0xff]
      %v420 = vld [vmem:[%s1 + $0x340] sm:$0xff]
      %v421 = vld [vmem:[%s1 + $0x348] sm:$0xff]
      %v422 = vld [vmem:[%s1 + $0x350] sm:$0xff]
      %v423 = vld [vmem:[%s1 + $0x358] sm:$0xff]
      %v424 = vld [vmem:[%s1 + $0x360] sm:$0xff]
      %v425 = vld [vmem:[%s1 + $0x368] sm:$0xff]
      %v426 = vld [vmem:[%s1 + $0x370] sm:$0xff]
      %v427 = vld [vmem:[%s1 + $0x378] sm:$0xff]
      %v428 = vld [vmem:[%s1 + $0x380] sm:$0xff]
      %v429 = vld [vmem:[%s1 + $0x388] sm:$0xff]
      %v430 = vld [vmem:[%s1 + $0x390] sm:$0xff]
      %v431 = vld [vmem:[%s1 + $0x398] sm:$0xff]
      %v432 = vld [vmem:[%s1 + $0x3a0] sm:$0xff]
      %v433 = vld [vmem:[%s1 + $0x3a8] sm:$0xff]
      %v434 = vld [vmem:[%s1 + $0x3b0] sm:$0xff]
      %v435 = vld [vmem:[%s1 + $0x3b8] sm:$0xff]
      %v436 = vld [vmem:[%s1 + $0x3c0] sm:$0xff]
      %v437 = vld [vmem:[%s1 + $0x3c8] sm:$0xff]
      %v438 = vld [vmem:[%s1 + $0x3d0] sm:$0xff]
      %v439 = vld [vmem:[%s1 + $0x3d8] sm:$0xff]
      %v440 = vld [vmem:[%s1 + $0x3e0] sm:$0xff]
      %v441 = vld [vmem:[%s1 + $0x3e8] sm:$0xff]
      %v442 = vld [vmem:[%s1 + $0x3f0] sm:$0xff]
      %v443 = vld [vmem:[%s1 + $0x3f8] sm:$0xff]
      %v444 = vld [vmem:[%s1 + $0x400] sm:$0xff]
      %v445 = vld [vmem:[%s1 + $0x408] sm:$0xff]
      %v446 = vld [vmem:[%s1 + $0x410] sm:$0xff]
      %v447 = vld [vmem:[%s1 + $0x418] sm:$0xff]
      %v448 = vld [vmem:[%s1 + $0x420] sm:$0xff]
      %v449 = vld [vmem:[%s1 + $0x428] sm:$0xff]
      %v450 = vld [vmem:[%s1 + $0x430] sm:$0xff]
      %v451 = vld [vmem:[%s1 + $0x438] sm:$0xff]
      %v452 = vld [vmem:[%s1 + $0x440] sm:$0xff]
      %v453 = vld [vmem:[%s1 + $0x448] sm:$0xff]
      %v454 = vld [vmem:[%s1 + $0x450] sm:$0xff]
      %v455 = vld [vmem:[%s1 + $0x458] sm:$0xff]
      %v456 = vld [vmem:[%s1 + $0x460] sm:$0xff]
      %v457 = vld [vmem:[%s1 + $0x468] sm:$0xff]
      %v458 = vld [vmem:[%s1 + $0x470] sm:$0xff]
      %v459 = vld [vmem:[%s1 + $0x478] sm:$0xff]
      %v460 = vld [vmem:[%s1 + $0x480] sm:$0xff]
      %v461 = vld [vmem:[%s1 + $0x488] sm:$0xff]
      %v462 = vld [vmem:[%s1 + $0x490] sm:$0xff]
      %v463 = vld [vmem:[%s1 + $0x498] sm:$0xff]
      %v464 = vld [vmem:[%s1 + $0x4a0] sm:$0xff]
      %v465 = vld [vmem:[%s1 + $0x4a8] sm:$0xff]
      %v466 = vld [vmem:[%s1 + $0x4b0] sm:$0xff]
      %v467 = vld [vmem:[%s1 + $0x4b8] sm:$0xff]
      %v468 = vld [vmem:[%s1 + $0x4c0] sm:$0xff]
      %v469 = vld [vmem:[%s1 + $0x4c8] sm:$0xff]
      %v470 = vld [vmem:[%s1 + $0x4d0] sm:$0xff]
      %v471 = vld [vmem:[%s1 + $0x4d8] sm:$0xff]
      %v472 = vld [vmem:[%s1 + $0x4e0] sm:$0xff]
      %v473 = vld [vmem:[%s1 + $0x4e8] sm:$0xff]
      %v474 = vld [vmem:[%s1 + $0x4f0] sm:$0xff]
      %v475 = vld [vmem:[%s1 + $0x4f8] sm:$0xff]
      %v476 = vld [vmem:[%s1 + $0x500] sm:$0xff]
      %v477 = vld [vmem:[%s1 + $0x508] sm:$0xff]
      %v478 = vld [vmem:[%s1 + $0x510] sm:$0xff]
      %v479 = vld [vmem:[%s1 + $0x518] sm:$0xff]
      %v480 = vld [vmem:[%s1 + $0x520] sm:$0xff]
      %v481 = vld [vmem:[%s1 + $0x528] sm:$0xff]
      %v482 = vld [vmem:[%s1 + $0x530] sm:$0xff]
      %v483 = vld [vmem:[%s1 + $0x538] sm:$0xff]
      %v484 = vld [vmem:[%s1 + $0x540] sm:$0xff]
      %v485 = vld [vmem:[%s1 + $0x548] sm:$0xff]
      %v486 = vld [vmem:[%s1 + $0x550] sm:$0xff]
      %v487 = vld [vmem:[%s1 + $0x558] sm:$0xff]
      %v488 = vld [vmem:[%s1 + $0x560] sm:$0xff]
      %v489 = vld [vmem:[%s1 + $0x568] sm:$0xff]
      %v490 = vld [vmem:[%s1 + $0x570] sm:$0xff]
      %v491 = vld [vmem:[%s1 + $0x578] sm:$0xff]
      %v492 = vld [vmem:[%s1 + $0x580] sm:$0xff]
      %v493 = vld [vmem:[%s1 + $0x588] sm:$0xff]
      %v494 = vld [vmem:[%s1 + $0x590] sm:$0xff]
      %v495 = vld [vmem:[%s1 + $0x598] sm:$0xff]
      %v496 = vld [vmem:[%s1 + $0x5a0] sm:$0xff]
      %v497 = vld [vmem:[%s1 + $0x5a8] sm:$0xff]
      %v498 = vld [vmem:[%s1 + $0x5b0] sm:$0xff]
      %v499 = vld [vmem:[%s1 + $0x5b8] sm:$0xff]
      %v500 = vld [vmem:[%s1 + $0x5c0] sm:$0xff]
      %v501 = vld [vmem:[%s1 + $0x5c8] sm:$0xff]
      %v502 = vld [vmem:[%s1 + $0x5d0] sm:$0xff]
      %v503 = vld [vmem:[%s1 + $0x5d8] sm:$0xff]
      %v504 = vld [vmem:[%s1 + $0x5e0] sm:$0xff]
      %v505 = vld [vmem:[%s1 + $0x5e8] sm:$0xff]
      %v506 = vld [vmem:[%s1 + $0x5f0] sm:$0xff]
      %v507 = vld [vmem:[%s1 + $0x5f8] sm:$0xff]
      %v508 = vld [vmem:[%s1 + $0x600] sm:$0xff]
      %v509 = vld [vmem:[%s1 + $0x608] sm:$0xff]
      %v510 = vld [vmem:[%s1 + $0x610] sm:$0xff]
      %v511 = vld [vmem:[%s1 + $0x618] sm:$0xff]
      %v512 = vld [vmem:[%s1 + $0x620] sm:$0xff]
      %v513 = vld [vmem:[%s1 + $0x628] sm:$0xff]
      %v514 = vld [vmem:[%s1 + $0x630] sm:$0xff]
      %v515 = vld [vmem:[%s1 + $0x638] sm:$0xff]
      %v516 = vld [vmem:[%s1 + $0x640] sm:$0xff]
      %v517 = vld [vmem:[%s1 + $0x648] sm:$0xff]
      %v518 = vld [vmem:[%s1 + $0x650] sm:$0xff]
      %v519 = vld [vmem:[%s1 + $0x658] sm:$0xff]
      %v520 = vld [vmem:[%s1 + $0x660] sm:$0xff]
      %v521 = vld [vmem:[%s1 + $0x668] sm:$0xff]
      %v522 = vld [vmem:[%s1 + $0x670] sm:$0xff]
      %v523 = vld [vmem:[%s1 + $0x678] sm:$0xff]
      %v524 = vld [vmem:[%s1 + $0x680] sm:$0xff]
      %v525 = vld [vmem:[%s1 + $0x688] sm:$0xff]
      %v526 = vld [vmem:[%s1 + $0x690] sm:$0xff]
      %v527 = vld [vmem:[%s1 + $0x698] sm:$0xff]
      %v528 = vld [vmem:[%s1 + $0x6a0] sm:$0xff]
      %v529 = vld [vmem:[%s1 + $0x6a8] sm:$0xff]
      %v530 = vld [vmem:[%s1 + $0x6b0] sm:$0xff]
      %v531 = vld [vmem:[%s1 + $0x6b8] sm:$0xff]
      %v532 = vld [vmem:[%s1 + $0x6c0] sm:$0xff]
      %v533 = vld [vmem:[%s1 + $0x6c8] sm:$0xff]
      %v534 = vld [vmem:[%s1 + $0x6d0] sm:$0xff]
      %v535 = vld [vmem:[%s1 + $0x6d8] sm:$0xff]
      %v536 = vld [vmem:[%s1 + $0x6e0] sm:$0xff]
      %v537 = vld [vmem:[%s1 + $0x6e8] sm:$0xff]
      %v538 = vld [vmem:[%s1 + $0x6f0] sm:$0xff]
      %v539 = vld [vmem:[%s1 + $0x6f8] sm:$0xff]
      %v540 = vld [vmem:[%s1 + $0x700] sm:$0xff]
      %v541 = vld [vmem:[%s1 + $0x708] sm:$0xff]
      %v542 = vld [vmem:[%s1 + $0x710] sm:$0xff]
      %v543 = vld [vmem:[%s1 + $0x718] sm:$0xff]
      %v544 = vld [vmem:[%s1 + $0x720] sm:$0xff]
      %v545 = vld [vmem:[%s1 + $0x728] sm:$0xff]
      %v546 = vld [vmem:[%s1 + $0x730] sm:$0xff]
      %v547 = vld [vmem:[%s1 + $0x738] sm:$0xff]
      %v548 = vld [vmem:[%s1 + $0x740] sm:$0xff]
      %v549 = vld [vmem:[%s1 + $0x748] sm:$0xff]
      %v550 = vld [vmem:[%s1 + $0x750] sm:$0xff]
      %v551 = vld [vmem:[%s1 + $0x758] sm:$0xff]
      %v552 = vld [vmem:[%s1 + $0x760] sm:$0xff]
      %v553 = vld [vmem:[%s1 + $0x768] sm:$0xff]
      %v554 = vld [vmem:[%s1 + $0x770] sm:$0xff]
      %v555 = vld [vmem:[%s1 + $0x778] sm:$0xff]
      %v556 = vld [vmem:[%s1 + $0x780] sm:$0xff]
      %v557 = vld [vmem:[%s1 + $0x788] sm:$0xff]
      %v558 = vld [vmem:[%s1 + $0x790] sm:$0xff]
      %v559 = vld [vmem:[%s1 + $0x798] sm:$0xff]
      %v560 = vld [vmem:[%s1 + $0x7a0] sm:$0xff]
      %v561 = vld [vmem:[%s1 + $0x7a8] sm:$0xff]
      %v562 = vld [vmem:[%s1 + $0x7b0] sm:$0xff]
      %v563 = vld [vmem:[%s1 + $0x7b8] sm:$0xff]
      %v564 = vld [vmem:[%s1 + $0x7c0] sm:$0xff]
      %v565 = vld [vmem:[%s1 + $0x7c8] sm:$0xff]
      %v566 = vld [vmem:[%s1 + $0x7d0] sm:$0xff]
      %v567 = vld [vmem:[%s1 + $0x7d8] sm:$0xff]
      %v568 = vld [vmem:[%s1 + $0x7e0] sm:$0xff]
      %v569 = vld [vmem:[%s1 + $0x7e8] sm:$0xff]
      %v570 = vld [vmem:[%s1 + $0x7f0] sm:$0xff]
      %v571 = vld [vmem:[%s1 + $0x7f8] sm:$0xff]
      %v572 = vld [vmem:[%s1 + $0x800] sm:$0xff]
      %v573 = vld [vmem:[%s1 + $0x808] sm:$0xff]
      %v574 = vld [vmem:[%s1 + $0x810] sm:$0xff]
      %v575 = vld [vmem:[%s1 + $0x818] sm:$0xff]
      %v576 = vld [vmem:[%s1 + $0x820] sm:$0xff]
      %v577 = vld [vmem:[%s1 + $0x828] sm:$0xff]
      %v578 = vld [vmem:[%s1 + $0x830] sm:$0xff]
      %v579 = vld [vmem:[%s1 + $0x838] sm:$0xff]
      %v580 = vld [vmem:[%s1 + $0x840] sm:$0xff]
      %v581 = vld [vmem:[%s1 + $0x848] sm:$0xff]
      %v582 = vld [vmem:[%s1 + $0x850] sm:$0xff]
      %v583 = vld [vmem:[%s1 + $0x858] sm:$0xff]
      %v584 = vld [vmem:[%s1 + $0x860] sm:$0xff]
      %v585 = vld [vmem:[%s1 + $0x868] sm:$0xff]
      %v586 = vld [vmem:[%s1 + $0x870] sm:$0xff]
      %v587 = vld [vmem:[%s1 + $0x878] sm:$0xff]
      %v588 = vld [vmem:[%s1 + $0x880] sm:$0xff]
      %v589 = vld [vmem:[%s1 + $0x888] sm:$0xff]
      %v590 = vld [vmem:[%s1 + $0x890] sm:$0xff]
      %v591 = vld [vmem:[%s1 + $0x898] sm:$0xff]
      %v592 = vld [vmem:[%s1 + $0x8a0] sm:$0xff]
      %v593 = vld [vmem:[%s1 + $0x8a8] sm:$0xff]
      %v594 = vld [vmem:[%s1 + $0x8b0] sm:$0xff]
      %v595 = vld [vmem:[%s1 + $0x8b8] sm:$0xff]
      %v596 = vld [vmem:[%s1 + $0x8c0] sm:$0xff]
      %v597 = vld [vmem:[%s1 + $0x8c8] sm:$0xff]
      %v598 = vld [vmem:[%s1 + $0x8d0] sm:$0xff]
      %v599 = vld [vmem:[%s1 + $0x8d8] sm:$0xff]
      %v600 = vld [vmem:[%s1 + $0x8e0] sm:$0xff]
      %v601 = vld [vmem:[%s1 + $0x8e8] sm:$0xff]
      %v602 = vld [vmem:[%s1 + $0x8f0] sm:$0xff]
      %v603 = vld [vmem:[%s1 + $0x8f8] sm:$0xff]
      %v604 = vld [vmem:[%s1 + $0x900] sm:$0xff]
      %v605 = vld [vmem:[%s1 + $0x908] sm:$0xff]
      %v606 = vld [vmem:[%s1 + $0x910] sm:$0xff]
      %v607 = vld [vmem:[%s1 + $0x918] sm:$0xff]
      %v608 = vld [vmem:[%s1 + $0x920] sm:$0xff]
      %v609 = vld [vmem:[%s1 + $0x928] sm:$0xff]
      %v610 = vld [vmem:[%s1 + $0x930] sm:$0xff]
      %v611 = vld [vmem:[%s1 + $0x938] sm:$0xff]
      %v612 = vld [vmem:[%s1 + $0x940] sm:$0xff]
      %v613 = vld [vmem:[%s1 + $0x948] sm:$0xff]
      %v614 = vld [vmem:[%s1 + $0x950] sm:$0xff]
      %v615 = vld [vmem:[%s1 + $0x958] sm:$0xff]
      %v616 = vld [vmem:[%s1 + $0x960] sm:$0xff]
      %v617 = vld [vmem:[%s1 + $0x968] sm:$0xff]
      %v618 = vld [vmem:[%s1 + $0x970] sm:$0xff]
      %v619 = vld [vmem:[%s1 + $0x978] sm:$0xff]
      %v620 = vld [vmem:[%s1 + $0x980] sm:$0xff]
      %v621 = vld [vmem:[%s1 + $0x988] sm:$0xff]
      %v622 = vld [vmem:[%s1 + $0x990] sm:$0xff]
      %v623 = vld [vmem:[%s1 + $0x998] sm:$0xff]
      %v624 = vld [vmem:[%s1 + $0x9a0] sm:$0xff]
      %v625 = vld [vmem:[%s1 + $0x9a8] sm:$0xff]
      %v626 = vld [vmem:[%s1 + $0x9b0] sm:$0xff]
      %v627 = vld [vmem:[%s1 + $0x9b8] sm:$0xff]
      %v628 = vld [vmem:[%s1 + $0x9c0] sm:$0xff]
      %v629 = vld [vmem:[%s1 + $0x9c8] sm:$0xff]
      %v630 = vld [vmem:[%s1 + $0x9d0] sm:$0xff]
      %v631 = vld [vmem:[%s1 + $0x9d8] sm:$0xff]
      %v632 = vld [vmem:[%s1 + $0x9e0] sm:$0xff]
      %v633 = vld [vmem:[%s1 + $0x9e8] sm:$0xff]
      %v634 = vld [vmem:[%s1 + $0x9f0] sm:$0xff]
      %v635 = vld [vmem:[%s1 + $0x9f8] sm:$0xff]
      %v636 = vld [vmem:[%s1 + $0xa00] sm:$0xff]
      %v637 = vld [vmem:[%s1 + $0xa08] sm:$0xff]
      %v638 = vld [vmem:[%s1 + $0xa10] sm:$0xff]
      %v639 = vld [vmem:[%s1 + $0xa18] sm:$0xff]
      %v640 = vld [vmem:[%s1 + $0xa20] sm:$0xff]
      %v641 = vld [vmem:[%s1 + $0xa28] sm:$0xff]
      %v642 = vld [vmem:[%s1 + $0xa30] sm:$0xff]
      %v643 = vld [vmem:[%s1 + $0xa38] sm:$0xff]
      %v644 = vld [vmem:[%s1 + $0xa40] sm:$0xff]
      %v645 = vld [vmem:[%s1 + $0xa48] sm:$0xff]
      %v646 = vld [vmem:[%s1 + $0xa50] sm:$0xff]
      %v647 = vld [vmem:[%s1 + $0xa58] sm:$0xff]
      %v648 = vld [vmem:[%s1 + $0xa60] sm:$0xff]
      %v649 = vld [vmem:[%s1 + $0xa68] sm:$0xff]
      %v650 = vld [vmem:[%s1 + $0xa70] sm:$0xff]
      %v651 = vld [vmem:[%s1 + $0xa78] sm:$0xff]
      %v652 = vld [vmem:[%s1 + $0xa80] sm:$0xff]
      %v653 = vld [vmem:[%s1 + $0xa88] sm:$0xff]
      %v654 = vld [vmem:[%s1 + $0xa90] sm:$0xff]
      %v655 = vld [vmem:[%s1 + $0xa98] sm:$0xff]
      %v656 = vld [vmem:[%s1 + $0xaa0] sm:$0xff]
      %v657 = vld [vmem:[%s1 + $0xaa8] sm:$0xff]
      %v658 = vld [vmem:[%s1 + $0xab0] sm:$0xff]
      %v659 = vld [vmem:[%s1 + $0xab8] sm:$0xff]
      %v660 = vld [vmem:[%s1 + $0xac0] sm:$0xff]
      %v661 = vld [vmem:[%s1 + $0xac8] sm:$0xff]
      %v662 = vld [vmem:[%s1 + $0xad0] sm:$0xff]
      %v663 = vld [vmem:[%s1 + $0xad8] sm:$0xff]
      %v664 = vld [vmem:[%s1 + $0xae0] sm:$0xff]
      %v665 = vld [vmem:[%s1 + $0xae8] sm:$0xff]
      %v666 = vld [vmem:[%s1 + $0xaf0] sm:$0xff]
      %v667 = vld [vmem:[%s1 + $0xaf8] sm:$0xff]
      %v668 = vld [vmem:[%s1 + $0xb00] sm:$0xff]
      %v669 = vld [vmem:[%s1 + $0xb08] sm:$0xff]
      %v670 = vld [vmem:[%s1 + $0xb10] sm:$0xff]
      %v671 = vld [vmem:[%s1 + $0xb18] sm:$0xff]
      %v672 = vld [vmem:[%s1 + $0xb20] sm:$0xff]
      %v673 = vld [vmem:[%s1 + $0xb28] sm:$0xff]
      %v674 = vld [vmem:[%s1 + $0xb30] sm:$0xff]
      %v675 = vld [vmem:[%s1 + $0xb38] sm:$0xff]
      %v676 = vld [vmem:[%s1 + $0xb40] sm:$0xff]
      %v677 = vld [vmem:[%s1 + $0xb48] sm:$0xff]
      %v678 = vld [vmem:[%s1 + $0xb50] sm:$0xff]
      %v679 = vld [vmem:[%s1 + $0xb58] sm:$0xff]
      %v680 = vld [vmem:[%s1 + $0xb60] sm:$0xff]
      %v681 = vld [vmem:[%s1 + $0xb68] sm:$0xff]
      %v682 = vld [vmem:[%s1 + $0xb70] sm:$0xff]
      %v683 = vld [vmem:[%s1 + $0xb78] sm:$0xff]
      %v684 = vld [vmem:[%s1 + $0xb80] sm:$0xff]
      %v685 = vld [vmem:[%s1 + $0xb88] sm:$0xff]
      %v686 = vld [vmem:[%s1 + $0xb90] sm:$0xff]
      %v687 = vld [vmem:[%s1 + $0xb98] sm:$0xff]
      %v688 = vld [vmem:[%s1 + $0xba0] sm:$0xff]
      %v689 = vld [vmem:[%s1 + $0xba8] sm:$0xff]
      %v690 = vld [vmem:[%s1 + $0xbb0] sm:$0xff]
      %v691 = vld [vmem:[%s1 + $0xbb8] sm:$0xff]
      %v692 = vld [vmem:[%s1 + $0xbc0] sm:$0xff]
      %v693 = vld [vmem:[%s1 + $0xbc8] sm:$0xff]
      %v694 = vld [vmem:[%s1 + $0xbd0] sm:$0xff]
      %v695 = vld [vmem:[%s1 + $0xbd8] sm:$0xff]
      %v696 = vld [vmem:[%s1 + $0xbe0] sm:$0xff]
      %v697 = vld [vmem:[%s1 + $0xbe8] sm:$0xff]
      %v698 = vld [vmem:[%s1 + $0xbf0] sm:$0xff]
      %v699 = vld [vmem:[%s1 + $0xbf8] sm:$0xff]
      %700 = vmatpush.msra.mxu0 %v267
      %701 = vmatpush.msra.mxu0 %v266
      %702 = vmatpush.msra.mxu0 %v265
      %703 = vmatpush.msra.mxu0 %v264
      %704 = vmatpush.msra.mxu0 %v263
      %705 = vmatpush.msra.mxu0 %v262
      %706 = vmatpush.msra.mxu0 %v261
      %707 = vmatpush.msra.mxu0 %v260
      %708 = vmatpush.msra.mxu0 %v259
      %709 = vmatpush.msra.mxu0 %v258
      %710 = vmatpush.msra.mxu0 %v257
      %711 = vmatpush.msra.mxu0 %v256
      %712 = vmatpush.msra.mxu0 %v255
      %713 = vmatpush.msra.mxu0 %v254
      %714 = vmatpush.msra.mxu0 %v253
      %715 = vmatpush.msra.mxu0 %v252
      %716 = vmatmul.f32.gmra.mxu0 %v316
      %v717 = vpop.f32.mrf.mxu0
      %v718 = vadd.f32 0.0, %v717
      %719 = vmatmul.f32.gmra.mxu0 %v320
      %v720 = vpop.f32.mrf.mxu0
      %v721 = vadd.f32 0.0, %v720
      %722 = vmatmul.f32.gmra.mxu0 %v324
      %v723 = vpop.f32.mrf.mxu0
      %v724 = vadd.f32 0.0, %v723
      %725 = vmatmul.f32.gmra.mxu0 %v328
      %v726 = vpop.f32.mrf.mxu0
      %v727 = vadd.f32 0.0, %v726
      %728 = vmatmul.f32.gmra.mxu0 %v332
      %v729 = vpop.f32.mrf.mxu0
      %v730 = vadd.f32 0.0, %v729
      %731 = vmatmul.f32.gmra.mxu0 %v336
      %v732 = vpop.f32.mrf.mxu0
      %v733 = vadd.f32 0.0, %v732
      %734 = vmatmul.f32.gmra.mxu0 %v340
      %v735 = vpop.f32.mrf.mxu0
      %v736 = vadd.f32 0.0, %v735
      %737 = vmatmul.f32.gmra.mxu0 %v344
      %v738 = vpop.f32.mrf.mxu0
      %v739 = vadd.f32 0.0, %v738
      %740 = vmatmul.f32.gmra.mxu0 %v348
      %v741 = vpop.f32.mrf.mxu0
      %v742 = vadd.f32 0.0, %v741
      %743 = vmatmul.f32.gmra.mxu0 %v352
      %v744 = vpop.f32.mrf.mxu0
      %v745 = vadd.f32 0.0, %v744
      %746 = vmatmul.f32.gmra.mxu0 %v356
      %v747 = vpop.f32.mrf.mxu0
      %v748 = vadd.f32 0.0, %v747
      %749 = vmatmul.f32.gmra.mxu0 %v360
      %v750 = vpop.f32.mrf.mxu0
      %v751 = vadd.f32 0.0, %v750
      %752 = vmatmul.f32.gmra.mxu0 %v364
      %v753 = vpop.f32.mrf.mxu0
      %v754 = vadd.f32 0.0, %v753
      %755 = vmatmul.f32.gmra.mxu0 %v368
      %v756 = vpop.f32.mrf.mxu0
      %v757 = vadd.f32 0.0, %v756
      %758 = vmatmul.f32.gmra.mxu0 %v372
      %v759 = vpop.f32.mrf.mxu0
      %v760 = vadd.f32 0.0, %v759
      %761 = vmatmul.f32.gmra.mxu0 %v376
      %v762 = vpop.f32.mrf.mxu0
      %v763 = vadd.f32 0.0, %v762
      %764 = vmatmul.f32.gmra.mxu0 %v380
      %v765 = vpop.f32.mrf.mxu0
      %v766 = vadd.f32 0.0, %v765
      %767 = vmatmul.f32.gmra.mxu0 %v384
      %v768 = vpop.f32.mrf.mxu0
      %v769 = vadd.f32 0.0, %v768
      %770 = vmatmul.f32.gmra.mxu0 %v388
      %v771 = vpop.f32.mrf.mxu0
      %v772 = vadd.f32 0.0, %v771
      %773 = vmatmul.f32.gmra.mxu0 %v392
      %v774 = vpop.f32.mrf.mxu0
      %v775 = vadd.f32 0.0, %v774
      %776 = vmatmul.f32.gmra.mxu0 %v396
      %v777 = vpop.f32.mrf.mxu0
      %v778 = vadd.f32 0.0, %v777
      %779 = vmatmul.f32.gmra.mxu0 %v400
      %v780 = vpop.f32.mrf.mxu0
      %v781 = vadd.f32 0.0, %v780
      %782 = vmatmul.f32.gmra.mxu0 %v404
      %v783 = vpop.f32.mrf.mxu0
      %v784 = vadd.f32 0.0, %v783
      %785 = vmatmul.f32.gmra.mxu0 %v408
      %v786 = vpop.f32.mrf.mxu0
      %v787 = vadd.f32 0.0, %v786
      %788 = vmatmul.f32.gmra.mxu0 %v412
      %v789 = vpop.f32.mrf.mxu0
      %v790 = vadd.f32 0.0, %v789
      %791 = vmatmul.f32.gmra.mxu0 %v416
      %v792 = vpop.f32.mrf.mxu0
      %v793 = vadd.f32 0.0, %v792
      %794 = vmatmul.f32.gmra.mxu0 %v420
      %v795 = vpop.f32.mrf.mxu0
      %v796 = vadd.f32 0.0, %v795
      %797 = vmatmul.f32.gmra.mxu0 %v424
      %v798 = vpop.f32.mrf.mxu0
      %v799 = vadd.f32 0.0, %v798
      %800 = vmatmul.f32.gmra.mxu0 %v428
      %v801 = vpop.f32.mrf.mxu0
      %v802 = vadd.f32 0.0, %v801
      %803 = vmatmul.f32.gmra.mxu0 %v432
      %v804 = vpop.f32.mrf.mxu0
      %v805 = vadd.f32 0.0, %v804
      %806 = vmatmul.f32.gmra.mxu0 %v436
      %v807 = vpop.f32.mrf.mxu0
      %v808 = vadd.f32 0.0, %v807
      %809 = vmatmul.f32.gmra.mxu0 %v440
      %v810 = vpop.f32.mrf.mxu0
      %v811 = vadd.f32 0.0, %v810
      %812 = vmatmul.f32.gmra.mxu0 %v444
      %v813 = vpop.f32.mrf.mxu0
      %v814 = vadd.f32 0.0, %v813
      %815 = vmatmul.f32.gmra.mxu0 %v448
      %v816 = vpop.f32.mrf.mxu0
      %v817 = vadd.f32 0.0, %v816
      %818 = vmatmul.f32.gmra.mxu0 %v452
      %v819 = vpop.f32.mrf.mxu0
      %v820 = vadd.f32 0.0, %v819
      %821 = vmatmul.f32.gmra.mxu0 %v456
      %v822 = vpop.f32.mrf.mxu0
      %v823 = vadd.f32 0.0, %v822
      %824 = vmatmul.f32.gmra.mxu0 %v460
      %v825 = vpop.f32.mrf.mxu0
      %v826 = vadd.f32 0.0, %v825
      %827 = vmatmul.f32.gmra.mxu0 %v464
      %v828 = vpop.f32.mrf.mxu0
      %v829 = vadd.f32 0.0, %v828
      %830 = vmatmul.f32.gmra.mxu0 %v468
      %v831 = vpop.f32.mrf.mxu0
      %v832 = vadd.f32 0.0, %v831
      %833 = vmatmul.f32.gmra.mxu0 %v472
      %v834 = vpop.f32.mrf.mxu0
      %v835 = vadd.f32 0.0, %v834
      %836 = vmatmul.f32.gmra.mxu0 %v476
      %v837 = vpop.f32.mrf.mxu0
      %v838 = vadd.f32 0.0, %v837
      %839 = vmatmul.f32.gmra.mxu0 %v480
      %v840 = vpop.f32.mrf.mxu0
      %v841 = vadd.f32 0.0, %v840
      %842 = vmatmul.f32.gmra.mxu0 %v484
      %v843 = vpop.f32.mrf.mxu0
      %v844 = vadd.f32 0.0, %v843
      %845 = vmatmul.f32.gmra.mxu0 %v488
      %v846 = vpop.f32.mrf.mxu0
      %v847 = vadd.f32 0.0, %v846
      %848 = vmatmul.f32.gmra.mxu0 %v492
      %v849 = vpop.f32.mrf.mxu0
      %v850 = vadd.f32 0.0, %v849
      %851 = vmatmul.f32.gmra.mxu0 %v496
      %v852 = vpop.f32.mrf.mxu0
      %v853 = vadd.f32 0.0, %v852
      %854 = vmatmul.f32.gmra.mxu0 %v500
      %v855 = vpop.f32.mrf.mxu0
      %v856 = vadd.f32 0.0, %v855
      %857 = vmatmul.f32.gmra.mxu0 %v504
      %v858 = vpop.f32.mrf.mxu0
      %v859 = vadd.f32 0.0, %v858
      %860 = vmatmul.f32.gmra.mxu0 %v508
      %v861 = vpop.f32.mrf.mxu0
      %v862 = vadd.f32 0.0, %v861
      %863 = vmatmul.f32.gmra.mxu0 %v512
      %v864 = vpop.f32.mrf.mxu0
      %v865 = vadd.f32 0.0, %v864
      %866 = vmatmul.f32.gmra.mxu0 %v516
      %v867 = vpop.f32.mrf.mxu0
      %v868 = vadd.f32 0.0, %v867
      %869 = vmatmul.f32.gmra.mxu0 %v520
      %v870 = vpop.f32.mrf.mxu0
      %v871 = vadd.f32 0.0, %v870
      %872 = vmatmul.f32.gmra.mxu0 %v524
      %v873 = vpop.f32.mrf.mxu0
      %v874 = vadd.f32 0.0, %v873
      %875 = vmatmul.f32.gmra.mxu0 %v528
      %v876 = vpop.f32.mrf.mxu0
      %v877 = vadd.f32 0.0, %v876
      %878 = vmatmul.f32.gmra.mxu0 %v532
      %v879 = vpop.f32.mrf.mxu0
      %v880 = vadd.f32 0.0, %v879
      %881 = vmatmul.f32.gmra.mxu0 %v536
      %v882 = vpop.f32.mrf.mxu0
      %v883 = vadd.f32 0.0, %v882
      %884 = vmatmul.f32.gmra.mxu0 %v540
      %v885 = vpop.f32.mrf.mxu0
      %v886 = vadd.f32 0.0, %v885
      %887 = vmatmul.f32.gmra.mxu0 %v544
      %v888 = vpop.f32.mrf.mxu0
      %v889 = vadd.f32 0.0, %v888
      %890 = vmatmul.f32.gmra.mxu0 %v548
      %v891 = vpop.f32.mrf.mxu0
      %v892 = vadd.f32 0.0, %v891
      %893 = vmatmul.f32.gmra.mxu0 %v552
      %v894 = vpop.f32.mrf.mxu0
      %v895 = vadd.f32 0.0, %v894
      %896 = vmatmul.f32.gmra.mxu0 %v556
      %v897 = vpop.f32.mrf.mxu0
      %v898 = vadd.f32 0.0, %v897
      %899 = vmatmul.f32.gmra.mxu0 %v560
      %v900 = vpop.f32.mrf.mxu0
      %v901 = vadd.f32 0.0, %v900
      %902 = vmatmul.f32.gmra.mxu0 %v564
      %v903 = vpop.f32.mrf.mxu0
      %v904 = vadd.f32 0.0, %v903
      %905 = vmatmul.f32.gmra.mxu0 %v568
      %v906 = vpop.f32.mrf.mxu0
      %v907 = vadd.f32 0.0, %v906
      %908 = vmatmul.f32.gmra.mxu0 %v572
      %v909 = vpop.f32.mrf.mxu0
      %v910 = vadd.f32 0.0, %v909
      %911 = vmatmul.f32.gmra.mxu0 %v576
      %v912 = vpop.f32.mrf.mxu0
      %v913 = vadd.f32 0.0, %v912
      %914 = vmatmul.f32.gmra.mxu0 %v580
      %v915 = vpop.f32.mrf.mxu0
      %v916 = vadd.f32 0.0, %v915
      %917 = vmatmul.f32.gmra.mxu0 %v584
      %v918 = vpop.f32.mrf.mxu0
      %v919 = vadd.f32 0.0, %v918
      %920 = vmatmul.f32.gmra.mxu0 %v588
      %v921 = vpop.f32.mrf.mxu0
      %v922 = vadd.f32 0.0, %v921
      %923 = vmatmul.f32.gmra.mxu0 %v592
      %v924 = vpop.f32.mrf.mxu0
      %v925 = vadd.f32 0.0, %v924
      %926 = vmatmul.f32.gmra.mxu0 %v596
      %v927 = vpop.f32.mrf.mxu0
      %v928 = vadd.f32 0.0, %v927
      %929 = vmatmul.f32.gmra.mxu0 %v600
      %v930 = vpop.f32.mrf.mxu0
      %v931 = vadd.f32 0.0, %v930
      %932 = vmatmul.f32.gmra.mxu0 %v604
      %v933 = vpop.f32.mrf.mxu0
      %v934 = vadd.f32 0.0, %v933
      %935 = vmatmul.f32.gmra.mxu0 %v608
      %v936 = vpop.f32.mrf.mxu0
      %v937 = vadd.f32 0.0, %v936
      %938 = vmatmul.f32.gmra.mxu0 %v612
      %v939 = vpop.f32.mrf.mxu0
      %v940 = vadd.f32 0.0, %v939
      %941 = vmatmul.f32.gmra.mxu0 %v616
      %v942 = vpop.f32.mrf.mxu0
      %v943 = vadd.f32 0.0, %v942
      %944 = vmatmul.f32.gmra.mxu0 %v620
      %v945 = vpop.f32.mrf.mxu0
      %v946 = vadd.f32 0.0, %v945
      %947 = vmatmul.f32.gmra.mxu0 %v624
      %v948 = vpop.f32.mrf.mxu0
      %v949 = vadd.f32 0.0, %v948
      %950 = vmatmul.f32.gmra.mxu0 %v628
      %v951 = vpop.f32.mrf.mxu0
      %v952 = vadd.f32 0.0, %v951
      %953 = vmatmul.f32.gmra.mxu0 %v632
      %v954 = vpop.f32.mrf.mxu0
      %v955 = vadd.f32 0.0, %v954
      %956 = vmatmul.f32.gmra.mxu0 %v636
      %v957 = vpop.f32.mrf.mxu0
      %v958 = vadd.f32 0.0, %v957
      %959 = vmatmul.f32.gmra.mxu0 %v640
      %v960 = vpop.f32.mrf.mxu0
      %v961 = vadd.f32 0.0, %v960
      %962 = vmatmul.f32.gmra.mxu0 %v644
      %v963 = vpop.f32.mrf.mxu0
      %v964 = vadd.f32 0.0, %v963
      %965 = vmatmul.f32.gmra.mxu0 %v648
      %v966 = vpop.f32.mrf.mxu0
      %v967 = vadd.f32 0.0, %v966
      %968 = vmatmul.f32.gmra.mxu0 %v652
      %v969 = vpop.f32.mrf.mxu0
      %v970 = vadd.f32 0.0, %v969
      %971 = vmatmul.f32.gmra.mxu0 %v656
      %v972 = vpop.f32.mrf.mxu0
      %v973 = vadd.f32 0.0, %v972
      %974 = vmatmul.f32.gmra.mxu0 %v660
      %v975 = vpop.f32.mrf.mxu0
      %v976 = vadd.f32 0.0, %v975
      %977 = vmatmul.f32.gmra.mxu0 %v664
      %v978 = vpop.f32.mrf.mxu0
      %v979 = vadd.f32 0.0, %v978
      %980 = vmatmul.f32.gmra.mxu0 %v668
      %v981 = vpop.f32.mrf.mxu0
      %v982 = vadd.f32 0.0, %v981
      %983 = vmatmul.f32.gmra.mxu0 %v672
      %v984 = vpop.f32.mrf.mxu0
      %v985 = vadd.f32 0.0, %v984
      %986 = vmatmul.f32.gmra.mxu0 %v676
      %v987 = vpop.f32.mrf.mxu0
      %v988 = vadd.f32 0.0, %v987
      %989 = vmatmul.f32.gmra.mxu0 %v680
      %v990 = vpop.f32.mrf.mxu0
      %v991 = vadd.f32 0.0, %v990
      %992 = vmatmul.f32.gmra.mxu0 %v684
      %v993 = vpop.f32.mrf.mxu0
      %v994 = vadd.f32 0.0, %v993
      %995 = vmatmul.f32.gmra.mxu0 %v688
      %v996 = vpop.f32.mrf.mxu0
      %v997 = vadd.f32 0.0, %v996
      %998 = vmatmul.f32.gmra.mxu0 %v692
      %v999 = vpop.f32.mrf.mxu0
      %v1000 = vadd.f32 0.0, %v999
      %1001 = vmatmul.f32.gmra.mxu0 %v696
      %v1002 = vpop.f32.mrf.mxu0
      %v1003 = vadd.f32 0.0, %v1002
      %1004 = vdwg.mxu0
      %1005 = vmatpush.msra.mxu0 %v283
      %1006 = vmatpush.msra.mxu0 %v282
      %1007 = vmatpush.msra.mxu0 %v281
      %1008 = vmatpush.msra.mxu0 %v280
      %1009 = vmatpush.msra.mxu0 %v279
      %1010 = vmatpush.msra.mxu0 %v278
      %1011 = vmatpush.msra.mxu0 %v277
      %1012 = vmatpush.msra.mxu0 %v276
      %1013 = vmatpush.msra.mxu0 %v275
      %1014 = vmatpush.msra.mxu0 %v274
      %1015 = vmatpush.msra.mxu0 %v273
      %1016 = vmatpush.msra.mxu0 %v272
      %1017 = vmatpush.msra.mxu0 %v271
      %1018 = vmatpush.msra.mxu0 %v270
      %1019 = vmatpush.msra.mxu0 %v269
      %1020 = vmatpush.msra.mxu0 %v268
      %1021 = vmatmul.f32.gmra.mxu0 %v317
      %v1022 = vpop.f32.mrf.mxu0
      %v1023 = vadd.f32 %v718, %v1022
      %1024 = vmatmul.f32.gmra.mxu0 %v321
      %v1025 = vpop.f32.mrf.mxu0
      %v1026 = vadd.f32 %v721, %v1025
      %1027 = vmatmul.f32.gmra.mxu0 %v325
      %v1028 = vpop.f32.mrf.mxu0
      %v1029 = vadd.f32 %v724, %v1028
      %1030 = vmatmul.f32.gmra.mxu0 %v329
      %v1031 = vpop.f32.mrf.mxu0
      %v1032 = vadd.f32 %v727, %v1031
      %1033 = vmatmul.f32.gmra.mxu0 %v333
      %v1034 = vpop.f32.mrf.mxu0
      %v1035 = vadd.f32 %v730, %v1034
      %1036 = vmatmul.f32.gmra.mxu0 %v337
      %v1037 = vpop.f32.mrf.mxu0
      %v1038 = vadd.f32 %v733, %v1037
      %1039 = vmatmul.f32.gmra.mxu0 %v341
      %v1040 = vpop.f32.mrf.mxu0
      %v1041 = vadd.f32 %v736, %v1040
      %1042 = vmatmul.f32.gmra.mxu0 %v345
      %v1043 = vpop.f32.mrf.mxu0
      %v1044 = vadd.f32 %v739, %v1043
      %1045 = vmatmul.f32.gmra.mxu0 %v349
      %v1046 = vpop.f32.mrf.mxu0
      %v1047 = vadd.f32 %v742, %v1046
      %1048 = vmatmul.f32.gmra.mxu0 %v353
      %v1049 = vpop.f32.mrf.mxu0
      %v1050 = vadd.f32 %v745, %v1049
      %1051 = vmatmul.f32.gmra.mxu0 %v357
      %v1052 = vpop.f32.mrf.mxu0
      %v1053 = vadd.f32 %v748, %v1052
      %1054 = vmatmul.f32.gmra.mxu0 %v361
      %v1055 = vpop.f32.mrf.mxu0
      %v1056 = vadd.f32 %v751, %v1055
      %1057 = vmatmul.f32.gmra.mxu0 %v365
      %v1058 = vpop.f32.mrf.mxu0
      %v1059 = vadd.f32 %v754, %v1058
      %1060 = vmatmul.f32.gmra.mxu0 %v369
      %v1061 = vpop.f32.mrf.mxu0
      %v1062 = vadd.f32 %v757, %v1061
      %1063 = vmatmul.f32.gmra.mxu0 %v373
      %v1064 = vpop.f32.mrf.mxu0
      %v1065 = vadd.f32 %v760, %v1064
      %1066 = vmatmul.f32.gmra.mxu0 %v377
      %v1067 = vpop.f32.mrf.mxu0
      %v1068 = vadd.f32 %v763, %v1067
      %1069 = vmatmul.f32.gmra.mxu0 %v381
      %v1070 = vpop.f32.mrf.mxu0
      %v1071 = vadd.f32 %v766, %v1070
      %1072 = vmatmul.f32.gmra.mxu0 %v385
      %v1073 = vpop.f32.mrf.mxu0
      %v1074 = vadd.f32 %v769, %v1073
      %1075 = vmatmul.f32.gmra.mxu0 %v389
      %v1076 = vpop.f32.mrf.mxu0
      %v1077 = vadd.f32 %v772, %v1076
      %1078 = vmatmul.f32.gmra.mxu0 %v393
      %v1079 = vpop.f32.mrf.mxu0
      %v1080 = vadd.f32 %v775, %v1079
      %1081 = vmatmul.f32.gmra.mxu0 %v397
      %v1082 = vpop.f32.mrf.mxu0
      %v1083 = vadd.f32 %v778, %v1082
      %1084 = vmatmul.f32.gmra.mxu0 %v401
      %v1085 = vpop.f32.mrf.mxu0
      %v1086 = vadd.f32 %v781, %v1085
      %1087 = vmatmul.f32.gmra.mxu0 %v405
      %v1088 = vpop.f32.mrf.mxu0
      %v1089 = vadd.f32 %v784, %v1088
      %1090 = vmatmul.f32.gmra.mxu0 %v409
      %v1091 = vpop.f32.mrf.mxu0
      %v1092 = vadd.f32 %v787, %v1091
      %1093 = vmatmul.f32.gmra.mxu0 %v413
      %v1094 = vpop.f32.mrf.mxu0
      %v1095 = vadd.f32 %v790, %v1094
      %1096 = vmatmul.f32.gmra.mxu0 %v417
      %v1097 = vpop.f32.mrf.mxu0
      %v1098 = vadd.f32 %v793, %v1097
      %1099 = vmatmul.f32.gmra.mxu0 %v421
      %v1100 = vpop.f32.mrf.mxu0
      %v1101 = vadd.f32 %v796, %v1100
      %1102 = vmatmul.f32.gmra.mxu0 %v425
      %v1103 = vpop.f32.mrf.mxu0
      %v1104 = vadd.f32 %v799, %v1103
      %1105 = vmatmul.f32.gmra.mxu0 %v429
      %v1106 = vpop.f32.mrf.mxu0
      %v1107 = vadd.f32 %v802, %v1106
      %1108 = vmatmul.f32.gmra.mxu0 %v433
      %v1109 = vpop.f32.mrf.mxu0
      %v1110 = vadd.f32 %v805, %v1109
      %1111 = vmatmul.f32.gmra.mxu0 %v437
      %v1112 = vpop.f32.mrf.mxu0
      %v1113 = vadd.f32 %v808, %v1112
      %1114 = vmatmul.f32.gmra.mxu0 %v441
      %v1115 = vpop.f32.mrf.mxu0
      %v1116 = vadd.f32 %v811, %v1115
      %1117 = vmatmul.f32.gmra.mxu0 %v445
      %v1118 = vpop.f32.mrf.mxu0
      %v1119 = vadd.f32 %v814, %v1118
      %1120 = vmatmul.f32.gmra.mxu0 %v449
      %v1121 = vpop.f32.mrf.mxu0
      %v1122 = vadd.f32 %v817, %v1121
      %1123 = vmatmul.f32.gmra.mxu0 %v453
      %v1124 = vpop.f32.mrf.mxu0
      %v1125 = vadd.f32 %v820, %v1124
      %1126 = vmatmul.f32.gmra.mxu0 %v457
      %v1127 = vpop.f32.mrf.mxu0
      %v1128 = vadd.f32 %v823, %v1127
      %1129 = vmatmul.f32.gmra.mxu0 %v461
      %v1130 = vpop.f32.mrf.mxu0
      %v1131 = vadd.f32 %v826, %v1130
      %1132 = vmatmul.f32.gmra.mxu0 %v465
      %v1133 = vpop.f32.mrf.mxu0
      %v1134 = vadd.f32 %v829, %v1133
      %1135 = vmatmul.f32.gmra.mxu0 %v469
      %v1136 = vpop.f32.mrf.mxu0
      %v1137 = vadd.f32 %v832, %v1136
      %1138 = vmatmul.f32.gmra.mxu0 %v473
      %v1139 = vpop.f32.mrf.mxu0
      %v1140 = vadd.f32 %v835, %v1139
      %1141 = vmatmul.f32.gmra.mxu0 %v477
      %v1142 = vpop.f32.mrf.mxu0
      %v1143 = vadd.f32 %v838, %v1142
      %1144 = vmatmul.f32.gmra.mxu0 %v481
      %v1145 = vpop.f32.mrf.mxu0
      %v1146 = vadd.f32 %v841, %v1145
      %1147 = vmatmul.f32.gmra.mxu0 %v485
      %v1148 = vpop.f32.mrf.mxu0
      %v1149 = vadd.f32 %v844, %v1148
      %1150 = vmatmul.f32.gmra.mxu0 %v489
      %v1151 = vpop.f32.mrf.mxu0
      %v1152 = vadd.f32 %v847, %v1151
      %1153 = vmatmul.f32.gmra.mxu0 %v493
      %v1154 = vpop.f32.mrf.mxu0
      %v1155 = vadd.f32 %v850, %v1154
      %1156 = vmatmul.f32.gmra.mxu0 %v497
      %v1157 = vpop.f32.mrf.mxu0
      %v1158 = vadd.f32 %v853, %v1157
      %1159 = vmatmul.f32.gmra.mxu0 %v501
      %v1160 = vpop.f32.mrf.mxu0
      %v1161 = vadd.f32 %v856, %v1160
      %1162 = vmatmul.f32.gmra.mxu0 %v505
      %v1163 = vpop.f32.mrf.mxu0
      %v1164 = vadd.f32 %v859, %v1163
      %1165 = vmatmul.f32.gmra.mxu0 %v509
      %v1166 = vpop.f32.mrf.mxu0
      %v1167 = vadd.f32 %v862, %v1166
      %1168 = vmatmul.f32.gmra.mxu0 %v513
      %v1169 = vpop.f32.mrf.mxu0
      %v1170 = vadd.f32 %v865, %v1169
      %1171 = vmatmul.f32.gmra.mxu0 %v517
      %v1172 = vpop.f32.mrf.mxu0
      %v1173 = vadd.f32 %v868, %v1172
      %1174 = vmatmul.f32.gmra.mxu0 %v521
      %v1175 = vpop.f32.mrf.mxu0
      %v1176 = vadd.f32 %v871, %v1175
      %1177 = vmatmul.f32.gmra.mxu0 %v525
      %v1178 = vpop.f32.mrf.mxu0
      %v1179 = vadd.f32 %v874, %v1178
      %1180 = vmatmul.f32.gmra.mxu0 %v529
      %v1181 = vpop.f32.mrf.mxu0
      %v1182 = vadd.f32 %v877, %v1181
      %1183 = vmatmul.f32.gmra.mxu0 %v533
      %v1184 = vpop.f32.mrf.mxu0
      %v1185 = vadd.f32 %v880, %v1184
      %1186 = vmatmul.f32.gmra.mxu0 %v537
      %v1187 = vpop.f32.mrf.mxu0
      %v1188 = vadd.f32 %v883, %v1187
      %1189 = vmatmul.f32.gmra.mxu0 %v541
      %v1190 = vpop.f32.mrf.mxu0
      %v1191 = vadd.f32 %v886, %v1190
      %1192 = vmatmul.f32.gmra.mxu0 %v545
      %v1193 = vpop.f32.mrf.mxu0
      %v1194 = vadd.f32 %v889, %v1193
      %1195 = vmatmul.f32.gmra.mxu0 %v549
      %v1196 = vpop.f32.mrf.mxu0
      %v1197 = vadd.f32 %v892, %v1196
      %1198 = vmatmul.f32.gmra.mxu0 %v553
      %v1199 = vpop.f32.mrf.mxu0
      %v1200 = vadd.f32 %v895, %v1199
      %1201 = vmatmul.f32.gmra.mxu0 %v557
      %v1202 = vpop.f32.mrf.mxu0
      %v1203 = vadd.f32 %v898, %v1202
      %1204 = vmatmul.f32.gmra.mxu0 %v561
      %v1205 = vpop.f32.mrf.mxu0
      %v1206 = vadd.f32 %v901, %v1205
      %1207 = vmatmul.f32.gmra.mxu0 %v565
      %v1208 = vpop.f32.mrf.mxu0
      %v1209 = vadd.f32 %v904, %v1208
      %1210 = vmatmul.f32.gmra.mxu0 %v569
      %v1211 = vpop.f32.mrf.mxu0
      %v1212 = vadd.f32 %v907, %v1211
      %1213 = vmatmul.f32.gmra.mxu0 %v573
      %v1214 = vpop.f32.mrf.mxu0
      %v1215 = vadd.f32 %v910, %v1214
      %1216 = vmatmul.f32.gmra.mxu0 %v577
      %v1217 = vpop.f32.mrf.mxu0
      %v1218 = vadd.f32 %v913, %v1217
      %1219 = vmatmul.f32.gmra.mxu0 %v581
      %v1220 = vpop.f32.mrf.mxu0
      %v1221 = vadd.f32 %v916, %v1220
      %1222 = vmatmul.f32.gmra.mxu0 %v585
      %v1223 = vpop.f32.mrf.mxu0
      %v1224 = vadd.f32 %v919, %v1223
      %1225 = vmatmul.f32.gmra.mxu0 %v589
      %v1226 = vpop.f32.mrf.mxu0
      %v1227 = vadd.f32 %v922, %v1226
      %1228 = vmatmul.f32.gmra.mxu0 %v593
      %v1229 = vpop.f32.mrf.mxu0
      %v1230 = vadd.f32 %v925, %v1229
      %1231 = vmatmul.f32.gmra.mxu0 %v597
      %v1232 = vpop.f32.mrf.mxu0
      %v1233 = vadd.f32 %v928, %v1232
      %1234 = vmatmul.f32.gmra.mxu0 %v601
      %v1235 = vpop.f32.mrf.mxu0
      %v1236 = vadd.f32 %v931, %v1235
      %1237 = vmatmul.f32.gmra.mxu0 %v605
      %v1238 = vpop.f32.mrf.mxu0
      %v1239 = vadd.f32 %v934, %v1238
      %1240 = vmatmul.f32.gmra.mxu0 %v609
      %v1241 = vpop.f32.mrf.mxu0
      %v1242 = vadd.f32 %v937, %v1241
      %1243 = vmatmul.f32.gmra.mxu0 %v613
      %v1244 = vpop.f32.mrf.mxu0
      %v1245 = vadd.f32 %v940, %v1244
      %1246 = vmatmul.f32.gmra.mxu0 %v617
      %v1247 = vpop.f32.mrf.mxu0
      %v1248 = vadd.f32 %v943, %v1247
      %1249 = vmatmul.f32.gmra.mxu0 %v621
      %v1250 = vpop.f32.mrf.mxu0
      %v1251 = vadd.f32 %v946, %v1250
      %1252 = vmatmul.f32.gmra.mxu0 %v625
      %v1253 = vpop.f32.mrf.mxu0
      %v1254 = vadd.f32 %v949, %v1253
      %1255 = vmatmul.f32.gmra.mxu0 %v629
      %v1256 = vpop.f32.mrf.mxu0
      %v1257 = vadd.f32 %v952, %v1256
      %1258 = vmatmul.f32.gmra.mxu0 %v633
      %v1259 = vpop.f32.mrf.mxu0
      %v1260 = vadd.f32 %v955, %v1259
      %1261 = vmatmul.f32.gmra.mxu0 %v637
      %v1262 = vpop.f32.mrf.mxu0
      %v1263 = vadd.f32 %v958, %v1262
      %1264 = vmatmul.f32.gmra.mxu0 %v641
      %v1265 = vpop.f32.mrf.mxu0
      %v1266 = vadd.f32 %v961, %v1265
      %1267 = vmatmul.f32.gmra.mxu0 %v645
      %v1268 = vpop.f32.mrf.mxu0
      %v1269 = vadd.f32 %v964, %v1268
      %1270 = vmatmul.f32.gmra.mxu0 %v649
      %v1271 = vpop.f32.mrf.mxu0
      %v1272 = vadd.f32 %v967, %v1271
      %1273 = vmatmul.f32.gmra.mxu0 %v653
      %v1274 = vpop.f32.mrf.mxu0
      %v1275 = vadd.f32 %v970, %v1274
      %1276 = vmatmul.f32.gmra.mxu0 %v657
      %v1277 = vpop.f32.mrf.mxu0
      %v1278 = vadd.f32 %v973, %v1277
      %1279 = vmatmul.f32.gmra.mxu0 %v661
      %v1280 = vpop.f32.mrf.mxu0
      %v1281 = vadd.f32 %v976, %v1280
      %1282 = vmatmul.f32.gmra.mxu0 %v665
      %v1283 = vpop.f32.mrf.mxu0
      %v1284 = vadd.f32 %v979, %v1283
      %1285 = vmatmul.f32.gmra.mxu0 %v669
      %v1286 = vpop.f32.mrf.mxu0
      %v1287 = vadd.f32 %v982, %v1286
      %1288 = vmatmul.f32.gmra.mxu0 %v673
      %v1289 = vpop.f32.mrf.mxu0
      %v1290 = vadd.f32 %v985, %v1289
      %1291 = vmatmul.f32.gmra.mxu0 %v677
      %v1292 = vpop.f32.mrf.mxu0
      %v1293 = vadd.f32 %v988, %v1292
      %1294 = vmatmul.f32.gmra.mxu0 %v681
      %v1295 = vpop.f32.mrf.mxu0
      %v1296 = vadd.f32 %v991, %v1295
      %1297 = vmatmul.f32.gmra.mxu0 %v685
      %v1298 = vpop.f32.mrf.mxu0
      %v1299 = vadd.f32 %v994, %v1298
      %1300 = vmatmul.f32.gmra.mxu0 %v689
      %v1301 = vpop.f32.mrf.mxu0
      %v1302 = vadd.f32 %v997, %v1301
      %1303 = vmatmul.f32.gmra.mxu0 %v693
      %v1304 = vpop.f32.mrf.mxu0
      %v1305 = vadd.f32 %v1000, %v1304
      %1306 = vmatmul.f32.gmra.mxu0 %v697
      %v1307 = vpop.f32.mrf.mxu0
      %v1308 = vadd.f32 %v1003, %v1307
      %1309 = vdwg.mxu0
      %1310 = vmatpush.msra.mxu0 %v299
      %1311 = vmatpush.msra.mxu0 %v298
      %1312 = vmatpush.msra.mxu0 %v297
      %1313 = vmatpush.msra.mxu0 %v296
      %1314 = vmatpush.msra.mxu0 %v295
      %1315 = vmatpush.msra.mxu0 %v294
      %1316 = vmatpush.msra.mxu0 %v293
      %1317 = vmatpush.msra.mxu0 %v292
      %1318 = vmatpush.msra.mxu0 %v291
      %1319 = vmatpush.msra.mxu0 %v290
      %1320 = vmatpush.msra.mxu0 %v289
      %1321 = vmatpush.msra.mxu0 %v288
      %1322 = vmatpush.msra.mxu0 %v287
      %1323 = vmatpush.msra.mxu0 %v286
      %1324 = vmatpush.msra.mxu0 %v285
      %1325 = vmatpush.msra.mxu0 %v284
      %1326 = vmatmul.f32.gmra.mxu0 %v318
      %v1327 = vpop.f32.mrf.mxu0
      %v1328 = vadd.f32 %v1023, %v1327
      %1329 = vmatmul.f32.gmra.mxu0 %v322
      %v1330 = vpop.f32.mrf.mxu0
      %v1331 = vadd.f32 %v1026, %v1330
      %1332 = vmatmul.f32.gmra.mxu0 %v326
      %v1333 = vpop.f32.mrf.mxu0
      %v1334 = vadd.f32 %v1029, %v1333
      %1335 = vmatmul.f32.gmra.mxu0 %v330
      %v1336 = vpop.f32.mrf.mxu0
      %v1337 = vadd.f32 %v1032, %v1336
      %1338 = vmatmul.f32.gmra.mxu0 %v334
      %v1339 = vpop.f32.mrf.mxu0
      %v1340 = vadd.f32 %v1035, %v1339
      %1341 = vmatmul.f32.gmra.mxu0 %v338
      %v1342 = vpop.f32.mrf.mxu0
      %v1343 = vadd.f32 %v1038, %v1342
      %1344 = vmatmul.f32.gmra.mxu0 %v342
      %v1345 = vpop.f32.mrf.mxu0
      %v1346 = vadd.f32 %v1041, %v1345
      %1347 = vmatmul.f32.gmra.mxu0 %v346
      %v1348 = vpop.f32.mrf.mxu0
      %v1349 = vadd.f32 %v1044, %v1348
      %1350 = vmatmul.f32.gmra.mxu0 %v350
      %v1351 = vpop.f32.mrf.mxu0
      %v1352 = vadd.f32 %v1047, %v1351
      %1353 = vmatmul.f32.gmra.mxu0 %v354
      %v1354 = vpop.f32.mrf.mxu0
      %v1355 = vadd.f32 %v1050, %v1354
      %1356 = vmatmul.f32.gmra.mxu0 %v358
      %v1357 = vpop.f32.mrf.mxu0
      %v1358 = vadd.f32 %v1053, %v1357
      %1359 = vmatmul.f32.gmra.mxu0 %v362
      %v1360 = vpop.f32.mrf.mxu0
      %v1361 = vadd.f32 %v1056, %v1360
      %1362 = vmatmul.f32.gmra.mxu0 %v366
      %v1363 = vpop.f32.mrf.mxu0
      %v1364 = vadd.f32 %v1059, %v1363
      %1365 = vmatmul.f32.gmra.mxu0 %v370
      %v1366 = vpop.f32.mrf.mxu0
      %v1367 = vadd.f32 %v1062, %v1366
      %1368 = vmatmul.f32.gmra.mxu0 %v374
      %v1369 = vpop.f32.mrf.mxu0
      %v1370 = vadd.f32 %v1065, %v1369
      %1371 = vmatmul.f32.gmra.mxu0 %v378
      %v1372 = vpop.f32.mrf.mxu0
      %v1373 = vadd.f32 %v1068, %v1372
      %1374 = vmatmul.f32.gmra.mxu0 %v382
      %v1375 = vpop.f32.mrf.mxu0
      %v1376 = vadd.f32 %v1071, %v1375
      %1377 = vmatmul.f32.gmra.mxu0 %v386
      %v1378 = vpop.f32.mrf.mxu0
      %v1379 = vadd.f32 %v1074, %v1378
      %1380 = vmatmul.f32.gmra.mxu0 %v390
      %v1381 = vpop.f32.mrf.mxu0
      %v1382 = vadd.f32 %v1077, %v1381
      %1383 = vmatmul.f32.gmra.mxu0 %v394
      %v1384 = vpop.f32.mrf.mxu0
      %v1385 = vadd.f32 %v1080, %v1384
      %1386 = vmatmul.f32.gmra.mxu0 %v398
      %v1387 = vpop.f32.mrf.mxu0
      %v1388 = vadd.f32 %v1083, %v1387
      %1389 = vmatmul.f32.gmra.mxu0 %v402
      %v1390 = vpop.f32.mrf.mxu0
      %v1391 = vadd.f32 %v1086, %v1390
      %1392 = vmatmul.f32.gmra.mxu0 %v406
      %v1393 = vpop.f32.mrf.mxu0
      %v1394 = vadd.f32 %v1089, %v1393
      %1395 = vmatmul.f32.gmra.mxu0 %v410
      %v1396 = vpop.f32.mrf.mxu0
      %v1397 = vadd.f32 %v1092, %v1396
      %1398 = vmatmul.f32.gmra.mxu0 %v414
      %v1399 = vpop.f32.mrf.mxu0
      %v1400 = vadd.f32 %v1095, %v1399
      %1401 = vmatmul.f32.gmra.mxu0 %v418
      %v1402 = vpop.f32.mrf.mxu0
      %v1403 = vadd.f32 %v1098, %v1402
      %1404 = vmatmul.f32.gmra.mxu0 %v422
      %v1405 = vpop.f32.mrf.mxu0
      %v1406 = vadd.f32 %v1101, %v1405
      %1407 = vmatmul.f32.gmra.mxu0 %v426
      %v1408 = vpop.f32.mrf.mxu0
      %v1409 = vadd.f32 %v1104, %v1408
      %1410 = vmatmul.f32.gmra.mxu0 %v430
      %v1411 = vpop.f32.mrf.mxu0
      %v1412 = vadd.f32 %v1107, %v1411
      %1413 = vmatmul.f32.gmra.mxu0 %v434
      %v1414 = vpop.f32.mrf.mxu0
      %v1415 = vadd.f32 %v1110, %v1414
      %1416 = vmatmul.f32.gmra.mxu0 %v438
      %v1417 = vpop.f32.mrf.mxu0
      %v1418 = vadd.f32 %v1113, %v1417
      %1419 = vmatmul.f32.gmra.mxu0 %v442
      %v1420 = vpop.f32.mrf.mxu0
      %v1421 = vadd.f32 %v1116, %v1420
      %1422 = vmatmul.f32.gmra.mxu0 %v446
      %v1423 = vpop.f32.mrf.mxu0
      %v1424 = vadd.f32 %v1119, %v1423
      %1425 = vmatmul.f32.gmra.mxu0 %v450
      %v1426 = vpop.f32.mrf.mxu0
      %v1427 = vadd.f32 %v1122, %v1426
      %1428 = vmatmul.f32.gmra.mxu0 %v454
      %v1429 = vpop.f32.mrf.mxu0
      %v1430 = vadd.f32 %v1125, %v1429
      %1431 = vmatmul.f32.gmra.mxu0 %v458
      %v1432 = vpop.f32.mrf.mxu0
      %v1433 = vadd.f32 %v1128, %v1432
      %1434 = vmatmul.f32.gmra.mxu0 %v462
      %v1435 = vpop.f32.mrf.mxu0
      %v1436 = vadd.f32 %v1131, %v1435
      %1437 = vmatmul.f32.gmra.mxu0 %v466
      %v1438 = vpop.f32.mrf.mxu0
      %v1439 = vadd.f32 %v1134, %v1438
      %1440 = vmatmul.f32.gmra.mxu0 %v470
      %v1441 = vpop.f32.mrf.mxu0
      %v1442 = vadd.f32 %v1137, %v1441
      %1443 = vmatmul.f32.gmra.mxu0 %v474
      %v1444 = vpop.f32.mrf.mxu0
      %v1445 = vadd.f32 %v1140, %v1444
      %1446 = vmatmul.f32.gmra.mxu0 %v478
      %v1447 = vpop.f32.mrf.mxu0
      %v1448 = vadd.f32 %v1143, %v1447
      %1449 = vmatmul.f32.gmra.mxu0 %v482
      %v1450 = vpop.f32.mrf.mxu0
      %v1451 = vadd.f32 %v1146, %v1450
      %1452 = vmatmul.f32.gmra.mxu0 %v486
      %v1453 = vpop.f32.mrf.mxu0
      %v1454 = vadd.f32 %v1149, %v1453
      %1455 = vmatmul.f32.gmra.mxu0 %v490
      %v1456 = vpop.f32.mrf.mxu0
      %v1457 = vadd.f32 %v1152, %v1456
      %1458 = vmatmul.f32.gmra.mxu0 %v494
      %v1459 = vpop.f32.mrf.mxu0
      %v1460 = vadd.f32 %v1155, %v1459
      %1461 = vmatmul.f32.gmra.mxu0 %v498
      %v1462 = vpop.f32.mrf.mxu0
      %v1463 = vadd.f32 %v1158, %v1462
      %1464 = vmatmul.f32.gmra.mxu0 %v502
      %v1465 = vpop.f32.mrf.mxu0
      %v1466 = vadd.f32 %v1161, %v1465
      %1467 = vmatmul.f32.gmra.mxu0 %v506
      %v1468 = vpop.f32.mrf.mxu0
      %v1469 = vadd.f32 %v1164, %v1468
      %1470 = vmatmul.f32.gmra.mxu0 %v510
      %v1471 = vpop.f32.mrf.mxu0
      %v1472 = vadd.f32 %v1167, %v1471
      %1473 = vmatmul.f32.gmra.mxu0 %v514
      %v1474 = vpop.f32.mrf.mxu0
      %v1475 = vadd.f32 %v1170, %v1474
      %1476 = vmatmul.f32.gmra.mxu0 %v518
      %v1477 = vpop.f32.mrf.mxu0
      %v1478 = vadd.f32 %v1173, %v1477
      %1479 = vmatmul.f32.gmra.mxu0 %v522
      %v1480 = vpop.f32.mrf.mxu0
      %v1481 = vadd.f32 %v1176, %v1480
      %1482 = vmatmul.f32.gmra.mxu0 %v526
      %v1483 = vpop.f32.mrf.mxu0
      %v1484 = vadd.f32 %v1179, %v1483
      %1485 = vmatmul.f32.gmra.mxu0 %v530
      %v1486 = vpop.f32.mrf.mxu0
      %v1487 = vadd.f32 %v1182, %v1486
      %1488 = vmatmul.f32.gmra.mxu0 %v534
      %v1489 = vpop.f32.mrf.mxu0
      %v1490 = vadd.f32 %v1185, %v1489
      %1491 = vmatmul.f32.gmra.mxu0 %v538
      %v1492 = vpop.f32.mrf.mxu0
      %v1493 = vadd.f32 %v1188, %v1492
      %1494 = vmatmul.f32.gmra.mxu0 %v542
      %v1495 = vpop.f32.mrf.mxu0
      %v1496 = vadd.f32 %v1191, %v1495
      %1497 = vmatmul.f32.gmra.mxu0 %v546
      %v1498 = vpop.f32.mrf.mxu0
      %v1499 = vadd.f32 %v1194, %v1498
      %1500 = vmatmul.f32.gmra.mxu0 %v550
      %v1501 = vpop.f32.mrf.mxu0
      %v1502 = vadd.f32 %v1197, %v1501
      %1503 = vmatmul.f32.gmra.mxu0 %v554
      %v1504 = vpop.f32.mrf.mxu0
      %v1505 = vadd.f32 %v1200, %v1504
      %1506 = vmatmul.f32.gmra.mxu0 %v558
      %v1507 = vpop.f32.mrf.mxu0
      %v1508 = vadd.f32 %v1203, %v1507
      %1509 = vmatmul.f32.gmra.mxu0 %v562
      %v1510 = vpop.f32.mrf.mxu0
      %v1511 = vadd.f32 %v1206, %v1510
      %1512 = vmatmul.f32.gmra.mxu0 %v566
      %v1513 = vpop.f32.mrf.mxu0
      %v1514 = vadd.f32 %v1209, %v1513
      %1515 = vmatmul.f32.gmra.mxu0 %v570
      %v1516 = vpop.f32.mrf.mxu0
      %v1517 = vadd.f32 %v1212, %v1516
      %1518 = vmatmul.f32.gmra.mxu0 %v574
      %v1519 = vpop.f32.mrf.mxu0
      %v1520 = vadd.f32 %v1215, %v1519
      %1521 = vmatmul.f32.gmra.mxu0 %v578
      %v1522 = vpop.f32.mrf.mxu0
      %v1523 = vadd.f32 %v1218, %v1522
      %1524 = vmatmul.f32.gmra.mxu0 %v582
      %v1525 = vpop.f32.mrf.mxu0
      %v1526 = vadd.f32 %v1221, %v1525
      %1527 = vmatmul.f32.gmra.mxu0 %v586
      %v1528 = vpop.f32.mrf.mxu0
      %v1529 = vadd.f32 %v1224, %v1528
      %1530 = vmatmul.f32.gmra.mxu0 %v590
      %v1531 = vpop.f32.mrf.mxu0
      %v1532 = vadd.f32 %v1227, %v1531
      %1533 = vmatmul.f32.gmra.mxu0 %v594
      %v1534 = vpop.f32.mrf.mxu0
      %v1535 = vadd.f32 %v1230, %v1534
      %1536 = vmatmul.f32.gmra.mxu0 %v598
      %v1537 = vpop.f32.mrf.mxu0
      %v1538 = vadd.f32 %v1233, %v1537
      %1539 = vmatmul.f32.gmra.mxu0 %v602
      %v1540 = vpop.f32.mrf.mxu0
      %v1541 = vadd.f32 %v1236, %v1540
      %1542 = vmatmul.f32.gmra.mxu0 %v606
      %v1543 = vpop.f32.mrf.mxu0
      %v1544 = vadd.f32 %v1239, %v1543
      %1545 = vmatmul.f32.gmra.mxu0 %v610
      %v1546 = vpop.f32.mrf.mxu0
      %v1547 = vadd.f32 %v1242, %v1546
      %1548 = vmatmul.f32.gmra.mxu0 %v614
      %v1549 = vpop.f32.mrf.mxu0
      %v1550 = vadd.f32 %v1245, %v1549
      %1551 = vmatmul.f32.gmra.mxu0 %v618
      %v1552 = vpop.f32.mrf.mxu0
      %v1553 = vadd.f32 %v1248, %v1552
      %1554 = vmatmul.f32.gmra.mxu0 %v622
      %v1555 = vpop.f32.mrf.mxu0
      %v1556 = vadd.f32 %v1251, %v1555
      %1557 = vmatmul.f32.gmra.mxu0 %v626
      %v1558 = vpop.f32.mrf.mxu0
      %v1559 = vadd.f32 %v1254, %v1558
      %1560 = vmatmul.f32.gmra.mxu0 %v630
      %v1561 = vpop.f32.mrf.mxu0
      %v1562 = vadd.f32 %v1257, %v1561
      %1563 = vmatmul.f32.gmra.mxu0 %v634
      %v1564 = vpop.f32.mrf.mxu0
      %v1565 = vadd.f32 %v1260, %v1564
      %1566 = vmatmul.f32.gmra.mxu0 %v638
      %v1567 = vpop.f32.mrf.mxu0
      %v1568 = vadd.f32 %v1263, %v1567
      %1569 = vmatmul.f32.gmra.mxu0 %v642
      %v1570 = vpop.f32.mrf.mxu0
      %v1571 = vadd.f32 %v1266, %v1570
      %1572 = vmatmul.f32.gmra.mxu0 %v646
      %v1573 = vpop.f32.mrf.mxu0
      %v1574 = vadd.f32 %v1269, %v1573
      %1575 = vmatmul.f32.gmra.mxu0 %v650
      %v1576 = vpop.f32.mrf.mxu0
      %v1577 = vadd.f32 %v1272, %v1576
      %1578 = vmatmul.f32.gmra.mxu0 %v654
      %v1579 = vpop.f32.mrf.mxu0
      %v1580 = vadd.f32 %v1275, %v1579
      %1581 = vmatmul.f32.gmra.mxu0 %v658
      %v1582 = vpop.f32.mrf.mxu0
      %v1583 = vadd.f32 %v1278, %v1582
      %1584 = vmatmul.f32.gmra.mxu0 %v662
      %v1585 = vpop.f32.mrf.mxu0
      %v1586 = vadd.f32 %v1281, %v1585
      %1587 = vmatmul.f32.gmra.mxu0 %v666
      %v1588 = vpop.f32.mrf.mxu0
      %v1589 = vadd.f32 %v1284, %v1588
      %1590 = vmatmul.f32.gmra.mxu0 %v670
      %v1591 = vpop.f32.mrf.mxu0
      %v1592 = vadd.f32 %v1287, %v1591
      %1593 = vmatmul.f32.gmra.mxu0 %v674
      %v1594 = vpop.f32.mrf.mxu0
      %v1595 = vadd.f32 %v1290, %v1594
      %1596 = vmatmul.f32.gmra.mxu0 %v678
      %v1597 = vpop.f32.mrf.mxu0
      %v1598 = vadd.f32 %v1293, %v1597
      %1599 = vmatmul.f32.gmra.mxu0 %v682
      %v1600 = vpop.f32.mrf.mxu0
      %v1601 = vadd.f32 %v1296, %v1600
      %1602 = vmatmul.f32.gmra.mxu0 %v686
      %v1603 = vpop.f32.mrf.mxu0
      %v1604 = vadd.f32 %v1299, %v1603
      %1605 = vmatmul.f32.gmra.mxu0 %v690
      %v1606 = vpop.f32.mrf.mxu0
      %v1607 = vadd.f32 %v1302, %v1606
      %1608 = vmatmul.f32.gmra.mxu0 %v694
      %v1609 = vpop.f32.mrf.mxu0
      %v1610 = vadd.f32 %v1305, %v1609
      %1611 = vmatmul.f32.gmra.mxu0 %v698
      %v1612 = vpop.f32.mrf.mxu0
      %v1613 = vadd.f32 %v1308, %v1612
      %1614 = vdwg.mxu0
      %1615 = vmatpush.msra.mxu0 %v315
      %1616 = vmatpush.msra.mxu0 %v314
      %1617 = vmatpush.msra.mxu0 %v313
      %1618 = vmatpush.msra.mxu0 %v312
      %1619 = vmatpush.msra.mxu0 %v311
      %1620 = vmatpush.msra.mxu0 %v310
      %1621 = vmatpush.msra.mxu0 %v309
      %1622 = vmatpush.msra.mxu0 %v308
      %1623 = vmatpush.msra.mxu0 %v307
      %1624 = vmatpush.msra.mxu0 %v306
      %1625 = vmatpush.msra.mxu0 %v305
      %1626 = vmatpush.msra.mxu0 %v304
      %1627 = vmatpush.msra.mxu0 %v303
      %1628 = vmatpush.msra.mxu0 %v302
      %1629 = vmatpush.msra.mxu0 %v301
      %1630 = vmatpush.msra.mxu0 %v300
      %1631 = vmatmul.f32.gmra.mxu0 %v319
      %v1632 = vpop.f32.mrf.mxu0
      %v1633 = vadd.f32 %v1328, %v1632
      %1634 = vmatmul.f32.gmra.mxu0 %v323
      %v1635 = vpop.f32.mrf.mxu0
      %v1636 = vadd.f32 %v1331, %v1635
      %1637 = vmatmul.f32.gmra.mxu0 %v327
      %v1638 = vpop.f32.mrf.mxu0
      %v1639 = vadd.f32 %v1334, %v1638
      %1640 = vmatmul.f32.gmra.mxu0 %v331
      %v1641 = vpop.f32.mrf.mxu0
      %v1642 = vadd.f32 %v1337, %v1641
      %1643 = vmatmul.f32.gmra.mxu0 %v335
      %v1644 = vpop.f32.mrf.mxu0
      %v1645 = vadd.f32 %v1340, %v1644
      %1646 = vmatmul.f32.gmra.mxu0 %v339
      %v1647 = vpop.f32.mrf.mxu0
      %v1648 = vadd.f32 %v1343, %v1647
      %1649 = vmatmul.f32.gmra.mxu0 %v343
      %v1650 = vpop.f32.mrf.mxu0
      %v1651 = vadd.f32 %v1346, %v1650
      %1652 = vmatmul.f32.gmra.mxu0 %v347
      %v1653 = vpop.f32.mrf.mxu0
      %v1654 = vadd.f32 %v1349, %v1653
      %1655 = vmatmul.f32.gmra.mxu0 %v351
      %v1656 = vpop.f32.mrf.mxu0
      %v1657 = vadd.f32 %v1352, %v1656
      %1658 = vmatmul.f32.gmra.mxu0 %v355
      %v1659 = vpop.f32.mrf.mxu0
      %v1660 = vadd.f32 %v1355, %v1659
      %1661 = vmatmul.f32.gmra.mxu0 %v359
      %v1662 = vpop.f32.mrf.mxu0
      %v1663 = vadd.f32 %v1358, %v1662
      %1664 = vmatmul.f32.gmra.mxu0 %v363
      %v1665 = vpop.f32.mrf.mxu0
      %v1666 = vadd.f32 %v1361, %v1665
      %1667 = vmatmul.f32.gmra.mxu0 %v367
      %v1668 = vpop.f32.mrf.mxu0
      %v1669 = vadd.f32 %v1364, %v1668
      %1670 = vmatmul.f32.gmra.mxu0 %v371
      %v1671 = vpop.f32.mrf.mxu0
      %v1672 = vadd.f32 %v1367, %v1671
      %1673 = vmatmul.f32.gmra.mxu0 %v375
      %v1674 = vpop.f32.mrf.mxu0
      %v1675 = vadd.f32 %v1370, %v1674
      %1676 = vmatmul.f32.gmra.mxu0 %v379
      %v1677 = vpop.f32.mrf.mxu0
      %v1678 = vadd.f32 %v1373, %v1677
      %1679 = vmatmul.f32.gmra.mxu0 %v383
      %v1680 = vpop.f32.mrf.mxu0
      %v1681 = vadd.f32 %v1376, %v1680
      %1682 = vmatmul.f32.gmra.mxu0 %v387
      %v1683 = vpop.f32.mrf.mxu0
      %v1684 = vadd.f32 %v1379, %v1683
      %1685 = vmatmul.f32.gmra.mxu0 %v391
      %v1686 = vpop.f32.mrf.mxu0
      %v1687 = vadd.f32 %v1382, %v1686
      %1688 = vmatmul.f32.gmra.mxu0 %v395
      %v1689 = vpop.f32.mrf.mxu0
      %v1690 = vadd.f32 %v1385, %v1689
      %1691 = vmatmul.f32.gmra.mxu0 %v399
      %v1692 = vpop.f32.mrf.mxu0
      %v1693 = vadd.f32 %v1388, %v1692
      %1694 = vmatmul.f32.gmra.mxu0 %v403
      %v1695 = vpop.f32.mrf.mxu0
      %v1696 = vadd.f32 %v1391, %v1695
      %1697 = vmatmul.f32.gmra.mxu0 %v407
      %v1698 = vpop.f32.mrf.mxu0
      %v1699 = vadd.f32 %v1394, %v1698
      %1700 = vmatmul.f32.gmra.mxu0 %v411
      %v1701 = vpop.f32.mrf.mxu0
      %v1702 = vadd.f32 %v1397, %v1701
      %1703 = vmatmul.f32.gmra.mxu0 %v415
      %v1704 = vpop.f32.mrf.mxu0
      %v1705 = vadd.f32 %v1400, %v1704
      %1706 = vmatmul.f32.gmra.mxu0 %v419
      %v1707 = vpop.f32.mrf.mxu0
      %v1708 = vadd.f32 %v1403, %v1707
      %1709 = vmatmul.f32.gmra.mxu0 %v423
      %v1710 = vpop.f32.mrf.mxu0
      %v1711 = vadd.f32 %v1406, %v1710
      %1712 = vmatmul.f32.gmra.mxu0 %v427
      %v1713 = vpop.f32.mrf.mxu0
      %v1714 = vadd.f32 %v1409, %v1713
      %1715 = vmatmul.f32.gmra.mxu0 %v431
      %v1716 = vpop.f32.mrf.mxu0
      %v1717 = vadd.f32 %v1412, %v1716
      %1718 = vmatmul.f32.gmra.mxu0 %v435
      %v1719 = vpop.f32.mrf.mxu0
      %v1720 = vadd.f32 %v1415, %v1719
      %1721 = vmatmul.f32.gmra.mxu0 %v439
      %v1722 = vpop.f32.mrf.mxu0
      %v1723 = vadd.f32 %v1418, %v1722
      %1724 = vmatmul.f32.gmra.mxu0 %v443
      %v1725 = vpop.f32.mrf.mxu0
      %v1726 = vadd.f32 %v1421, %v1725
      %1727 = vmatmul.f32.gmra.mxu0 %v447
      %v1728 = vpop.f32.mrf.mxu0
      %v1729 = vadd.f32 %v1424, %v1728
      %1730 = vmatmul.f32.gmra.mxu0 %v451
      %v1731 = vpop.f32.mrf.mxu0
      %v1732 = vadd.f32 %v1427, %v1731
      %1733 = vmatmul.f32.gmra.mxu0 %v455
      %v1734 = vpop.f32.mrf.mxu0
      %v1735 = vadd.f32 %v1430, %v1734
      %1736 = vmatmul.f32.gmra.mxu0 %v459
      %v1737 = vpop.f32.mrf.mxu0
      %v1738 = vadd.f32 %v1433, %v1737
      %1739 = vmatmul.f32.gmra.mxu0 %v463
      %v1740 = vpop.f32.mrf.mxu0
      %v1741 = vadd.f32 %v1436, %v1740
      %1742 = vmatmul.f32.gmra.mxu0 %v467
      %v1743 = vpop.f32.mrf.mxu0
      %v1744 = vadd.f32 %v1439, %v1743
      %1745 = vmatmul.f32.gmra.mxu0 %v471
      %v1746 = vpop.f32.mrf.mxu0
      %v1747 = vadd.f32 %v1442, %v1746
      %1748 = vmatmul.f32.gmra.mxu0 %v475
      %v1749 = vpop.f32.mrf.mxu0
      %v1750 = vadd.f32 %v1445, %v1749
      %1751 = vmatmul.f32.gmra.mxu0 %v479
      %v1752 = vpop.f32.mrf.mxu0
      %v1753 = vadd.f32 %v1448, %v1752
      %1754 = vmatmul.f32.gmra.mxu0 %v483
      %v1755 = vpop.f32.mrf.mxu0
      %v1756 = vadd.f32 %v1451, %v1755
      %1757 = vmatmul.f32.gmra.mxu0 %v487
      %v1758 = vpop.f32.mrf.mxu0
      %v1759 = vadd.f32 %v1454, %v1758
      %1760 = vmatmul.f32.gmra.mxu0 %v491
      %v1761 = vpop.f32.mrf.mxu0
      %v1762 = vadd.f32 %v1457, %v1761
      %1763 = vmatmul.f32.gmra.mxu0 %v495
      %v1764 = vpop.f32.mrf.mxu0
      %v1765 = vadd.f32 %v1460, %v1764
      %1766 = vmatmul.f32.gmra.mxu0 %v499
      %v1767 = vpop.f32.mrf.mxu0
      %v1768 = vadd.f32 %v1463, %v1767
      %1769 = vmatmul.f32.gmra.mxu0 %v503
      %v1770 = vpop.f32.mrf.mxu0
      %v1771 = vadd.f32 %v1466, %v1770
      %1772 = vmatmul.f32.gmra.mxu0 %v507
      %v1773 = vpop.f32.mrf.mxu0
      %v1774 = vadd.f32 %v1469, %v1773
      %1775 = vmatmul.f32.gmra.mxu0 %v511
      %v1776 = vpop.f32.mrf.mxu0
      %v1777 = vadd.f32 %v1472, %v1776
      %1778 = vmatmul.f32.gmra.mxu0 %v515
      %v1779 = vpop.f32.mrf.mxu0
      %v1780 = vadd.f32 %v1475, %v1779
      %1781 = vmatmul.f32.gmra.mxu0 %v519
      %v1782 = vpop.f32.mrf.mxu0
      %v1783 = vadd.f32 %v1478, %v1782
      %1784 = vmatmul.f32.gmra.mxu0 %v523
      %v1785 = vpop.f32.mrf.mxu0
      %v1786 = vadd.f32 %v1481, %v1785
      %1787 = vmatmul.f32.gmra.mxu0 %v527
      %v1788 = vpop.f32.mrf.mxu0
      %v1789 = vadd.f32 %v1484, %v1788
      %1790 = vmatmul.f32.gmra.mxu0 %v531
      %v1791 = vpop.f32.mrf.mxu0
      %v1792 = vadd.f32 %v1487, %v1791
      %1793 = vmatmul.f32.gmra.mxu0 %v535
      %v1794 = vpop.f32.mrf.mxu0
      %v1795 = vadd.f32 %v1490, %v1794
      %1796 = vmatmul.f32.gmra.mxu0 %v539
      %v1797 = vpop.f32.mrf.mxu0
      %v1798 = vadd.f32 %v1493, %v1797
      %1799 = vmatmul.f32.gmra.mxu0 %v543
      %v1800 = vpop.f32.mrf.mxu0
      %v1801 = vadd.f32 %v1496, %v1800
      %1802 = vmatmul.f32.gmra.mxu0 %v547
      %v1803 = vpop.f32.mrf.mxu0
      %v1804 = vadd.f32 %v1499, %v1803
      %1805 = vmatmul.f32.gmra.mxu0 %v551
      %v1806 = vpop.f32.mrf.mxu0
      %v1807 = vadd.f32 %v1502, %v1806
      %1808 = vmatmul.f32.gmra.mxu0 %v555
      %v1809 = vpop.f32.mrf.mxu0
      %v1810 = vadd.f32 %v1505, %v1809
      %1811 = vmatmul.f32.gmra.mxu0 %v559
      %v1812 = vpop.f32.mrf.mxu0
      %v1813 = vadd.f32 %v1508, %v1812
      %1814 = vmatmul.f32.gmra.mxu0 %v563
      %v1815 = vpop.f32.mrf.mxu0
      %v1816 = vadd.f32 %v1511, %v1815
      %1817 = vmatmul.f32.gmra.mxu0 %v567
      %v1818 = vpop.f32.mrf.mxu0
      %v1819 = vadd.f32 %v1514, %v1818
      %1820 = vmatmul.f32.gmra.mxu0 %v571
      %v1821 = vpop.f32.mrf.mxu0
      %v1822 = vadd.f32 %v1517, %v1821
      %1823 = vmatmul.f32.gmra.mxu0 %v575
      %v1824 = vpop.f32.mrf.mxu0
      %v1825 = vadd.f32 %v1520, %v1824
      %1826 = vmatmul.f32.gmra.mxu0 %v579
      %v1827 = vpop.f32.mrf.mxu0
      %v1828 = vadd.f32 %v1523, %v1827
      %1829 = vmatmul.f32.gmra.mxu0 %v583
      %v1830 = vpop.f32.mrf.mxu0
      %v1831 = vadd.f32 %v1526, %v1830
      %1832 = vmatmul.f32.gmra.mxu0 %v587
      %v1833 = vpop.f32.mrf.mxu0
      %v1834 = vadd.f32 %v1529, %v1833
      %1835 = vmatmul.f32.gmra.mxu0 %v591
      %v1836 = vpop.f32.mrf.mxu0
      %v1837 = vadd.f32 %v1532, %v1836
      %1838 = vmatmul.f32.gmra.mxu0 %v595
      %v1839 = vpop.f32.mrf.mxu0
      %v1840 = vadd.f32 %v1535, %v1839
      %1841 = vmatmul.f32.gmra.mxu0 %v599
      %v1842 = vpop.f32.mrf.mxu0
      %v1843 = vadd.f32 %v1538, %v1842
      %1844 = vmatmul.f32.gmra.mxu0 %v603
      %v1845 = vpop.f32.mrf.mxu0
      %v1846 = vadd.f32 %v1541, %v1845
      %1847 = vmatmul.f32.gmra.mxu0 %v607
      %v1848 = vpop.f32.mrf.mxu0
      %v1849 = vadd.f32 %v1544, %v1848
      %1850 = vmatmul.f32.gmra.mxu0 %v611
      %v1851 = vpop.f32.mrf.mxu0
      %v1852 = vadd.f32 %v1547, %v1851
      %1853 = vmatmul.f32.gmra.mxu0 %v615
      %v1854 = vpop.f32.mrf.mxu0
      %v1855 = vadd.f32 %v1550, %v1854
      %1856 = vmatmul.f32.gmra.mxu0 %v619
      %v1857 = vpop.f32.mrf.mxu0
      %v1858 = vadd.f32 %v1553, %v1857
      %1859 = vmatmul.f32.gmra.mxu0 %v623
      %v1860 = vpop.f32.mrf.mxu0
      %v1861 = vadd.f32 %v1556, %v1860
      %1862 = vmatmul.f32.gmra.mxu0 %v627
      %v1863 = vpop.f32.mrf.mxu0
      %v1864 = vadd.f32 %v1559, %v1863
      %1865 = vmatmul.f32.gmra.mxu0 %v631
      %v1866 = vpop.f32.mrf.mxu0
      %v1867 = vadd.f32 %v1562, %v1866
      %1868 = vmatmul.f32.gmra.mxu0 %v635
      %v1869 = vpop.f32.mrf.mxu0
      %v1870 = vadd.f32 %v1565, %v1869
      %1871 = vmatmul.f32.gmra.mxu0 %v639
      %v1872 = vpop.f32.mrf.mxu0
      %v1873 = vadd.f32 %v1568, %v1872
      %1874 = vmatmul.f32.gmra.mxu0 %v643
      %v1875 = vpop.f32.mrf.mxu0
      %v1876 = vadd.f32 %v1571, %v1875
      %1877 = vmatmul.f32.gmra.mxu0 %v647
      %v1878 = vpop.f32.mrf.mxu0
      %v1879 = vadd.f32 %v1574, %v1878
      %1880 = vmatmul.f32.gmra.mxu0 %v651
      %v1881 = vpop.f32.mrf.mxu0
      %v1882 = vadd.f32 %v1577, %v1881
      %1883 = vmatmul.f32.gmra.mxu0 %v655
      %v1884 = vpop.f32.mrf.mxu0
      %v1885 = vadd.f32 %v1580, %v1884
      %1886 = vmatmul.f32.gmra.mxu0 %v659
      %v1887 = vpop.f32.mrf.mxu0
      %v1888 = vadd.f32 %v1583, %v1887
      %1889 = vmatmul.f32.gmra.mxu0 %v663
      %v1890 = vpop.f32.mrf.mxu0
      %v1891 = vadd.f32 %v1586, %v1890
      %1892 = vmatmul.f32.gmra.mxu0 %v667
      %v1893 = vpop.f32.mrf.mxu0
      %v1894 = vadd.f32 %v1589, %v1893
      %1895 = vmatmul.f32.gmra.mxu0 %v671
      %v1896 = vpop.f32.mrf.mxu0
      %v1897 = vadd.f32 %v1592, %v1896
      %1898 = vmatmul.f32.gmra.mxu0 %v675
      %v1899 = vpop.f32.mrf.mxu0
      %v1900 = vadd.f32 %v1595, %v1899
      %1901 = vmatmul.f32.gmra.mxu0 %v679
      %v1902 = vpop.f32.mrf.mxu0
      %v1903 = vadd.f32 %v1598, %v1902
      %1904 = vmatmul.f32.gmra.mxu0 %v683
      %v1905 = vpop.f32.mrf.mxu0
      %v1906 = vadd.f32 %v1601, %v1905
      %1907 = vmatmul.f32.gmra.mxu0 %v687
      %v1908 = vpop.f32.mrf.mxu0
      %v1909 = vadd.f32 %v1604, %v1908
      %1910 = vmatmul.f32.gmra.mxu0 %v691
      %v1911 = vpop.f32.mrf.mxu0
      %v1912 = vadd.f32 %v1607, %v1911
      %1913 = vmatmul.f32.gmra.mxu0 %v695
      %v1914 = vpop.f32.mrf.mxu0
      %v1915 = vadd.f32 %v1610, %v1914
      %1916 = vmatmul.f32.gmra.mxu0 %v699
      %v1917 = vpop.f32.mrf.mxu0
      %v1918 = vadd.f32 %v1613, %v1917
      %1919 = vdwg.mxu0
      %v1920 = vmul.f32 %v1633, %v1633
      %v1921 = vmul.f32 %v1636, %v1636
      %v1922 = vmul.f32 %v1639, %v1639
      %v1923 = vmul.f32 %v1642, %v1642
      %v1924 = vmul.f32 %v1645, %v1645
      %v1925 = vmul.f32 %v1648, %v1648
      %v1926 = vmul.f32 %v1651, %v1651
      %v1927 = vmul.f32 %v1654, %v1654
      %v1928 = vmul.f32 %v1657, %v1657
      %v1929 = vmul.f32 %v1660, %v1660
      %v1930 = vmul.f32 %v1663, %v1663
      %v1931 = vmul.f32 %v1666, %v1666
      %v1932 = vmul.f32 %v1669, %v1669
      %v1933 = vmul.f32 %v1672, %v1672
      %v1934 = vmul.f32 %v1675, %v1675
      %v1935 = vmul.f32 %v1678, %v1678
      %v1936 = vmul.f32 %v1681, %v1681
      %v1937 = vmul.f32 %v1684, %v1684
      %v1938 = vmul.f32 %v1687, %v1687
      %v1939 = vmul.f32 %v1690, %v1690
      %v1940 = vmul.f32 %v1693, %v1693
      %v1941 = vmul.f32 %v1696, %v1696
      %v1942 = vmul.f32 %v1699, %v1699
      %v1943 = vmul.f32 %v1702, %v1702
      %v1944 = vmul.f32 %v1705, %v1705
      %v1945 = vmul.f32 %v1708, %v1708
      %v1946 = vmul.f32 %v1711, %v1711
      %v1947 = vmul.f32 %v1714, %v1714
      %v1948 = vmul.f32 %v1717, %v1717
      %v1949 = vmul.f32 %v1720, %v1720
      %v1950 = vmul.f32 %v1723, %v1723
      %v1951 = vmul.f32 %v1726, %v1726
      %v1952 = vmul.f32 %v1729, %v1729
      %v1953 = vmul.f32 %v1732, %v1732
      %v1954 = vmul.f32 %v1735, %v1735
      %v1955 = vmul.f32 %v1738, %v1738
      %v1956 = vmul.f32 %v1741, %v1741
      %v1957 = vmul.f32 %v1744, %v1744
      %v1958 = vmul.f32 %v1747, %v1747
      %v1959 = vmul.f32 %v1750, %v1750
      %v1960 = vmul.f32 %v1753, %v1753
      %v1961 = vmul.f32 %v1756, %v1756
      %v1962 = vmul.f32 %v1759, %v1759
      %v1963 = vmul.f32 %v1762, %v1762
      %v1964 = vmul.f32 %v1765, %v1765
      %v1965 = vmul.f32 %v1768, %v1768
      %v1966 = vmul.f32 %v1771, %v1771
      %v1967 = vmul.f32 %v1774, %v1774
      %v1968 = vmul.f32 %v1777, %v1777
      %v1969 = vmul.f32 %v1780, %v1780
      %v1970 = vmul.f32 %v1783, %v1783
      %v1971 = vmul.f32 %v1786, %v1786
      %v1972 = vmul.f32 %v1789, %v1789
      %v1973 = vmul.f32 %v1792, %v1792
      %v1974 = vmul.f32 %v1795, %v1795
      %v1975 = vmul.f32 %v1798, %v1798
      %v1976 = vmul.f32 %v1801, %v1801
      %v1977 = vmul.f32 %v1804, %v1804
      %v1978 = vmul.f32 %v1807, %v1807
      %v1979 = vmul.f32 %v1810, %v1810
      %v1980 = vmul.f32 %v1813, %v1813
      %v1981 = vmul.f32 %v1816, %v1816
      %v1982 = vmul.f32 %v1819, %v1819
      %v1983 = vmul.f32 %v1822, %v1822
      %v1984 = vmul.f32 %v1825, %v1825
      %v1985 = vmul.f32 %v1828, %v1828
      %v1986 = vmul.f32 %v1831, %v1831
      %v1987 = vmul.f32 %v1834, %v1834
      %v1988 = vmul.f32 %v1837, %v1837
      %v1989 = vmul.f32 %v1840, %v1840
      %v1990 = vmul.f32 %v1843, %v1843
      %v1991 = vmul.f32 %v1846, %v1846
      %v1992 = vmul.f32 %v1849, %v1849
      %v1993 = vmul.f32 %v1852, %v1852
      %v1994 = vmul.f32 %v1855, %v1855
      %v1995 = vmul.f32 %v1858, %v1858
      %v1996 = vmul.f32 %v1861, %v1861
      %v1997 = vmul.f32 %v1864, %v1864
      %v1998 = vmul.f32 %v1867, %v1867
      %v1999 = vmul.f32 %v1870, %v1870
      %v2000 = vmul.f32 %v1873, %v1873
      %v2001 = vmul.f32 %v1876, %v1876
      %v2002 = vmul.f32 %v1879, %v1879
      %v2003 = vmul.f32 %v1882, %v1882
      %v2004 = vmul.f32 %v1885, %v1885
      %v2005 = vmul.f32 %v1888, %v1888
      %v2006 = vmul.f32 %v1891, %v1891
      %v2007 = vmul.f32 %v1894, %v1894
      %v2008 = vmul.f32 %v1897, %v1897
      %v2009 = vmul.f32 %v1900, %v1900
      %v2010 = vmul.f32 %v1903, %v1903
      %v2011 = vmul.f32 %v1906, %v1906
      %v2012 = vmul.f32 %v1909, %v1909
      %v2013 = vmul.f32 %v1912, %v1912
      %v2014 = vmul.f32 %v1915, %v1915
      %v2015 = vmul.f32 %v1918, %v1918
      %v2016 = vadd.f32 %v1920, %v1968
      %v2017 = vadd.f32 %v1921, %v1969
      %v2018 = vadd.f32 %v1922, %v1970
      %v2019 = vadd.f32 %v1923, %v1971
      %v2020 = vadd.f32 %v1924, %v1972
      %v2021 = vadd.f32 %v1925, %v1973
      %v2022 = vadd.f32 %v1926, %v1974
      %v2023 = vadd.f32 %v1927, %v1975
      %v2024 = vadd.f32 %v1928, %v1976
      %v2025 = vadd.f32 %v1929, %v1977
      %v2026 = vadd.f32 %v1930, %v1978
      %v2027 = vadd.f32 %v1931, %v1979
      %v2028 = vadd.f32 %v1932, %v1980
      %v2029 = vadd.f32 %v1933, %v1981
      %v2030 = vadd.f32 %v1934, %v1982
      %v2031 = vadd.f32 %v1935, %v1983
      %v2032 = vadd.f32 %v1936, %v1984
      %v2033 = vadd.f32 %v1937, %v1985
      %v2034 = vadd.f32 %v1938, %v1986
      %v2035 = vadd.f32 %v1939, %v1987
      %v2036 = vadd.f32 %v1940, %v1988
      %v2037 = vadd.f32 %v1941, %v1989
      %v2038 = vadd.f32 %v1942, %v1990
      %v2039 = vadd.f32 %v1943, %v1991
      %v2040 = vadd.f32 %v1944, %v1992
      %v2041 = vadd.f32 %v1945, %v1993
      %v2042 = vadd.f32 %v1946, %v1994
      %v2043 = vadd.f32 %v1947, %v1995
      %v2044 = vadd.f32 %v1948, %v1996
      %v2045 = vadd.f32 %v1949, %v1997
      %v2046 = vadd.f32 %v1950, %v1998
      %v2047 = vadd.f32 %v1951, %v1999
      %v2048 = vadd.f32 %v1952, %v2000
      %v2049 = vadd.f32 %v1953, %v2001
      %v2050 = vadd.f32 %v1954, %v2002
      %v2051 = vadd.f32 %v1955, %v2003
      %v2052 = vadd.f32 %v1956, %v2004
      %v2053 = vadd.f32 %v1957, %v2005
      %v2054 = vadd.f32 %v1958, %v2006
      %v2055 = vadd.f32 %v1959, %v2007
      %v2056 = vadd.f32 %v1960, %v2008
      %v2057 = vadd.f32 %v1961, %v2009
      %v2058 = vadd.f32 %v1962, %v2010
      %v2059 = vadd.f32 %v1963, %v2011
      %v2060 = vadd.f32 %v1964, %v2012
      %v2061 = vadd.f32 %v1965, %v2013
      %v2062 = vadd.f32 %v1966, %v2014
      %v2063 = vadd.f32 %v1967, %v2015
      %v2064 = vadd.f32 %v2016, 1e-18
      %v2065 = vadd.f32 %v2017, 1e-18
      %v2066 = vadd.f32 %v2018, 1e-18
      %v2067 = vadd.f32 %v2019, 1e-18
      %v2068 = vadd.f32 %v2020, 1e-18
      %v2069 = vadd.f32 %v2021, 1e-18
      %v2070 = vadd.f32 %v2022, 1e-18
      %v2071 = vadd.f32 %v2023, 1e-18
      %v2072 = vadd.f32 %v2024, 1e-18
      %v2073 = vadd.f32 %v2025, 1e-18
      %v2074 = vadd.f32 %v2026, 1e-18
      %v2075 = vadd.f32 %v2027, 1e-18
      %v2076 = vadd.f32 %v2028, 1e-18
      %v2077 = vadd.f32 %v2029, 1e-18
      %v2078 = vadd.f32 %v2030, 1e-18
      %v2079 = vadd.f32 %v2031, 1e-18
      %v2080 = vadd.f32 %v2032, 1e-18
      %v2081 = vadd.f32 %v2033, 1e-18
      %v2082 = vadd.f32 %v2034, 1e-18
      %v2083 = vadd.f32 %v2035, 1e-18
      %v2084 = vadd.f32 %v2036, 1e-18
      %v2085 = vadd.f32 %v2037, 1e-18
      %v2086 = vadd.f32 %v2038, 1e-18
      %v2087 = vadd.f32 %v2039, 1e-18
      %v2088 = vadd.f32 %v2040, 1e-18
      %v2089 = vadd.f32 %v2041, 1e-18
      %v2090 = vadd.f32 %v2042, 1e-18
      %v2091 = vadd.f32 %v2043, 1e-18
      %v2092 = vadd.f32 %v2044, 1e-18
      %v2093 = vadd.f32 %v2045, 1e-18
      %v2094 = vadd.f32 %v2046, 1e-18
      %v2095 = vadd.f32 %v2047, 1e-18
      %v2096 = vadd.f32 %v2048, 1e-18
      %v2097 = vadd.f32 %v2049, 1e-18
      %v2098 = vadd.f32 %v2050, 1e-18
      %v2099 = vadd.f32 %v2051, 1e-18
      %v2100 = vadd.f32 %v2052, 1e-18
      %v2101 = vadd.f32 %v2053, 1e-18
      %v2102 = vadd.f32 %v2054, 1e-18
      %v2103 = vadd.f32 %v2055, 1e-18
      %v2104 = vadd.f32 %v2056, 1e-18
      %v2105 = vadd.f32 %v2057, 1e-18
      %v2106 = vadd.f32 %v2058, 1e-18
      %v2107 = vadd.f32 %v2059, 1e-18
      %v2108 = vadd.f32 %v2060, 1e-18
      %v2109 = vadd.f32 %v2061, 1e-18
      %v2110 = vadd.f32 %v2062, 1e-18
      %v2111 = vadd.f32 %v2063, 1e-18
      %v2112 = vlog2.pop %v2064
      %v2113 = vmul.f32 %v2112, 0.6931472
      %v2114 = vlog2.pop %v2065
      %v2115 = vmul.f32 %v2114, 0.6931472
      %v2116 = vlog2.pop %v2066
      %v2117 = vmul.f32 %v2116, 0.6931472
      %v2118 = vlog2.pop %v2067
      %v2119 = vmul.f32 %v2118, 0.6931472
      %v2120 = vlog2.pop %v2068
      %v2121 = vmul.f32 %v2120, 0.6931472
      %v2122 = vlog2.pop %v2069
      %v2123 = vmul.f32 %v2122, 0.6931472
      %v2124 = vlog2.pop %v2070
      %v2125 = vmul.f32 %v2124, 0.6931472
      %v2126 = vlog2.pop %v2071
      %v2127 = vmul.f32 %v2126, 0.6931472
      %v2128 = vlog2.pop %v2072
      %v2129 = vmul.f32 %v2128, 0.6931472
      %v2130 = vlog2.pop %v2073
      %v2131 = vmul.f32 %v2130, 0.6931472
      %v2132 = vlog2.pop %v2074
      %v2133 = vmul.f32 %v2132, 0.6931472
      %v2134 = vlog2.pop %v2075
      %v2135 = vmul.f32 %v2134, 0.6931472
      %v2136 = vlog2.pop %v2076
      %v2137 = vmul.f32 %v2136, 0.6931472
      %v2138 = vlog2.pop %v2077
      %v2139 = vmul.f32 %v2138, 0.6931472
      %v2140 = vlog2.pop %v2078
      %v2141 = vmul.f32 %v2140, 0.6931472
      %v2142 = vlog2.pop %v2079
      %v2143 = vmul.f32 %v2142, 0.6931472
      %v2144 = vlog2.pop %v2080
      %v2145 = vmul.f32 %v2144, 0.6931472
      %v2146 = vlog2.pop %v2081
      %v2147 = vmul.f32 %v2146, 0.6931472
      %v2148 = vlog2.pop %v2082
      %v2149 = vmul.f32 %v2148, 0.6931472
      %v2150 = vlog2.pop %v2083
      %v2151 = vmul.f32 %v2150, 0.6931472
      %v2152 = vlog2.pop %v2084
      %v2153 = vmul.f32 %v2152, 0.6931472
      %v2154 = vlog2.pop %v2085
      %v2155 = vmul.f32 %v2154, 0.6931472
      %v2156 = vlog2.pop %v2086
      %v2157 = vmul.f32 %v2156, 0.6931472
      %v2158 = vlog2.pop %v2087
      %v2159 = vmul.f32 %v2158, 0.6931472
      %v2160 = vlog2.pop %v2088
      %v2161 = vmul.f32 %v2160, 0.6931472
      %v2162 = vlog2.pop %v2089
      %v2163 = vmul.f32 %v2162, 0.6931472
      %v2164 = vlog2.pop %v2090
      %v2165 = vmul.f32 %v2164, 0.6931472
      %v2166 = vlog2.pop %v2091
      %v2167 = vmul.f32 %v2166, 0.6931472
      %v2168 = vlog2.pop %v2092
      %v2169 = vmul.f32 %v2168, 0.6931472
      %v2170 = vlog2.pop %v2093
      %v2171 = vmul.f32 %v2170, 0.6931472
      %v2172 = vlog2.pop %v2094
      %v2173 = vmul.f32 %v2172, 0.6931472
      %v2174 = vlog2.pop %v2095
      %v2175 = vmul.f32 %v2174, 0.6931472
      %v2176 = vlog2.pop %v2096
      %v2177 = vmul.f32 %v2176, 0.6931472
      %v2178 = vlog2.pop %v2097
      %v2179 = vmul.f32 %v2178, 0.6931472
      %v2180 = vlog2.pop %v2098
      %v2181 = vmul.f32 %v2180, 0.6931472
      %v2182 = vlog2.pop %v2099
      %v2183 = vmul.f32 %v2182, 0.6931472
      %v2184 = vlog2.pop %v2100
      %v2185 = vmul.f32 %v2184, 0.6931472
      %v2186 = vlog2.pop %v2101
      %v2187 = vmul.f32 %v2186, 0.6931472
      %v2188 = vlog2.pop %v2102
      %v2189 = vmul.f32 %v2188, 0.6931472
      %v2190 = vlog2.pop %v2103
      %v2191 = vmul.f32 %v2190, 0.6931472
      %v2192 = vlog2.pop %v2104
      %v2193 = vmul.f32 %v2192, 0.6931472
      %v2194 = vlog2.pop %v2105
      %v2195 = vmul.f32 %v2194, 0.6931472
      %v2196 = vlog2.pop %v2106
      %v2197 = vmul.f32 %v2196, 0.6931472
      %v2198 = vlog2.pop %v2107
      %v2199 = vmul.f32 %v2198, 0.6931472
      %v2200 = vlog2.pop %v2108
      %v2201 = vmul.f32 %v2200, 0.6931472
      %v2202 = vlog2.pop %v2109
      %v2203 = vmul.f32 %v2202, 0.6931472
      %v2204 = vlog2.pop %v2110
      %v2205 = vmul.f32 %v2204, 0.6931472
      %v2206 = vlog2.pop %v2111
      %v2207 = vmul.f32 %v2206, 0.6931472
      %v2208 = vmul.f32 %v2113, 0.5
      %v2209 = vmul.f32 %v2115, 0.5
      %v2210 = vmul.f32 %v2117, 0.5
      %v2211 = vmul.f32 %v2119, 0.5
      %v2212 = vmul.f32 %v2121, 0.5
      %v2213 = vmul.f32 %v2123, 0.5
      %v2214 = vmul.f32 %v2125, 0.5
      %v2215 = vmul.f32 %v2127, 0.5
      %v2216 = vmul.f32 %v2129, 0.5
      %v2217 = vmul.f32 %v2131, 0.5
      %v2218 = vmul.f32 %v2133, 0.5
      %v2219 = vmul.f32 %v2135, 0.5
      %v2220 = vmul.f32 %v2137, 0.5
      %v2221 = vmul.f32 %v2139, 0.5
      %v2222 = vmul.f32 %v2141, 0.5
      %v2223 = vmul.f32 %v2143, 0.5
      %v2224 = vmul.f32 %v2145, 0.5
      %v2225 = vmul.f32 %v2147, 0.5
      %v2226 = vmul.f32 %v2149, 0.5
      %v2227 = vmul.f32 %v2151, 0.5
      %v2228 = vmul.f32 %v2153, 0.5
      %v2229 = vmul.f32 %v2155, 0.5
      %v2230 = vmul.f32 %v2157, 0.5
      %v2231 = vmul.f32 %v2159, 0.5
      %v2232 = vmul.f32 %v2161, 0.5
      %v2233 = vmul.f32 %v2163, 0.5
      %v2234 = vmul.f32 %v2165, 0.5
      %v2235 = vmul.f32 %v2167, 0.5
      %v2236 = vmul.f32 %v2169, 0.5
      %v2237 = vmul.f32 %v2171, 0.5
      %v2238 = vmul.f32 %v2173, 0.5
      %v2239 = vmul.f32 %v2175, 0.5
      %v2240 = vmul.f32 %v2177, 0.5
      %v2241 = vmul.f32 %v2179, 0.5
      %v2242 = vmul.f32 %v2181, 0.5
      %v2243 = vmul.f32 %v2183, 0.5
      %v2244 = vmul.f32 %v2185, 0.5
      %v2245 = vmul.f32 %v2187, 0.5
      %v2246 = vmul.f32 %v2189, 0.5
      %v2247 = vmul.f32 %v2191, 0.5
      %v2248 = vmul.f32 %v2193, 0.5
      %v2249 = vmul.f32 %v2195, 0.5
      %v2250 = vmul.f32 %v2197, 0.5
      %v2251 = vmul.f32 %v2199, 0.5
      %v2252 = vmul.f32 %v2201, 0.5
      %v2253 = vmul.f32 %v2203, 0.5
      %v2254 = vmul.f32 %v2205, 0.5
      %v2255 = vmul.f32 %v2207, 0.5
      %v2256 = vld [vmem:[%s2] sm:$0xff]
      %v2257 = vld [vmem:[%s2 + $0x8] sm:$0xf]
      %v2258 = vld [vmem:[%s2 + $0xc] sm:$0xff]
      %v2259 = vld [vmem:[%s2 + $0x14] sm:$0xf]
      %v2260 = vld [vmem:[%s2 + $0x18] sm:$0xff]
      %v2261 = vld [vmem:[%s2 + $0x20] sm:$0xf]
      %v2262 = vld [vmem:[%s2 + $0x24] sm:$0xff]
      %v2263 = vld [vmem:[%s2 + $0x2c] sm:$0xf]
      %v2264 = vld [vmem:[%s2 + $0x30] sm:$0xff]
      %v2265 = vld [vmem:[%s2 + $0x38] sm:$0xf]
      %v2266 = vld [vmem:[%s2 + $0x3c] sm:$0xff]
      %v2267 = vld [vmem:[%s2 + $0x44] sm:$0xf]
      %v2268 = vld [vmem:[%s2 + $0x48] sm:$0xff]
      %v2269 = vld [vmem:[%s2 + $0x50] sm:$0xf]
      %v2270 = vld [vmem:[%s2 + $0x54] sm:$0xff]
      %v2271 = vld [vmem:[%s2 + $0x5c] sm:$0xf]
      %v2272 = vld [vmem:[%s2 + $0x60] sm:$0xff]
      %v2273 = vld [vmem:[%s2 + $0x68] sm:$0xf]
      %v2274 = vld [vmem:[%s2 + $0x6c] sm:$0xff]
      %v2275 = vld [vmem:[%s2 + $0x74] sm:$0xf]
      %v2276 = vpack.c.bf16 %v2209, %v2208
      %v2277 = vpack.c.bf16 %v2211, %v2210
      %v2278 = vpack.c.bf16 %v2213, %v2212
      %v2279 = vpack.c.bf16 %v2215, %v2214
      %v2280 = vpack.c.bf16 %v2217, %v2216
      %v2281 = vpack.c.bf16 %v2219, %v2218
      %v2282 = vpack.c.bf16 %v2221, %v2220
      %v2283 = vpack.c.bf16 %v2223, %v2222
      %v2284 = vpack.c.bf16 %v2225, %v2224
      %v2285 = vpack.c.bf16 %v2227, %v2226
      %v2286 = vpack.c.bf16 %v2229, %v2228
      %v2287 = vpack.c.bf16 %v2231, %v2230
      %v2288 = vpack.c.bf16 %v2233, %v2232
      %v2289 = vpack.c.bf16 %v2235, %v2234
      %v2290 = vpack.c.bf16 %v2237, %v2236
      %v2291 = vpack.c.bf16 %v2239, %v2238
      %v2292 = vpack.c.bf16 %v2241, %v2240
      %v2293 = vpack.c.bf16 %v2243, %v2242
      %v2294 = vpack.c.bf16 %v2245, %v2244
      %v2295 = vpack.c.bf16 %v2247, %v2246
      %v2296 = vpack.c.bf16 %v2249, %v2248
      %v2297 = vpack.c.bf16 %v2251, %v2250
      %v2298 = vpack.c.bf16 %v2253, %v2252
      %v2299 = vpack.c.bf16 %v2255, %v2254
      %v2320 = vunpack.c.l.b16 %v2256
      %v2321 = vunpack.c.h.b16 %v2256
      %v2322 = vunpack.c.l.b16 %v2257
      %v2323 = vunpack.c.l.b16 %v2258
      %v2324 = vunpack.c.h.b16 %v2258
      %v2325 = vunpack.c.l.b16 %v2259
      %v2326 = vunpack.c.l.b16 %v2260
      %v2327 = vunpack.c.h.b16 %v2260
      %v2328 = vunpack.c.l.b16 %v2261
      %v2329 = vunpack.c.l.b16 %v2262
      %v2330 = vunpack.c.h.b16 %v2262
      %v2331 = vunpack.c.l.b16 %v2263
      %v2332 = vunpack.c.l.b16 %v2264
      %v2333 = vunpack.c.h.b16 %v2264
      %v2334 = vunpack.c.l.b16 %v2265
      %v2335 = vunpack.c.l.b16 %v2266
      %v2336 = vunpack.c.h.b16 %v2266
      %v2337 = vunpack.c.l.b16 %v2267
      %v2338 = vunpack.c.l.b16 %v2268
      %v2339 = vunpack.c.h.b16 %v2268
      %v2340 = vunpack.c.l.b16 %v2269
      %v2341 = vunpack.c.l.b16 %v2270
      %v2342 = vunpack.c.h.b16 %v2270
      %v2343 = vunpack.c.l.b16 %v2271
      %v2344 = vunpack.c.l.b16 %v2272
      %v2345 = vunpack.c.h.b16 %v2272
      %v2346 = vunpack.c.l.b16 %v2273
      %v2347 = vunpack.c.l.b16 %v2274
      %v2348 = vunpack.c.h.b16 %v2274
      %v2349 = vunpack.c.l.b16 %v2275
      %v2350 = vpack.c.b16 %v2323, %v2320
      %v2351 = vpack.c.b16 %v2324, %v2321
      %v2352 = vpack.c.b16 %v2325, %v2322
      %v2353 = vpack.c.b16 %v2329, %v2326
      %v2354 = vpack.c.b16 %v2330, %v2327
      %v2355 = vpack.c.b16 %v2331, %v2328
      %v2356 = vpack.c.b16 %v2335, %v2332
      %v2357 = vpack.c.b16 %v2336, %v2333
      %v2358 = vpack.c.b16 %v2337, %v2334
      %v2359 = vpack.c.b16 %v2341, %v2338
      %v2360 = vpack.c.b16 %v2342, %v2339
      %v2361 = vpack.c.b16 %v2343, %v2340
      %v2362 = vpack.c.b16 %v2347, %v2344
      %v2363 = vpack.c.b16 %v2348, %v2345
      %v2364 = vpack.c.b16 %v2349, %v2346
      %2380 = vmatpush.bf16.msra.mxu0 %v2283
      %2381 = vmatpush.bf16.msra.mxu0 %v2282
      %2382 = vmatpush.bf16.msra.mxu0 %v2281
      %2383 = vmatpush.bf16.msra.mxu0 %v2280
      %2384 = vmatpush.bf16.msra.mxu0 %v2279
      %2385 = vmatpush.bf16.msra.mxu0 %v2278
      %2386 = vmatpush.bf16.msra.mxu0 %v2277
      %2387 = vmatpush.bf16.msra.mxu0 %v2276
      %2388 = vmatmul.bf16.gmra.mxu0 %v2350
      %v2389 = vpop.f32.mrf.mxu0
      %v2390 = vadd.f32 0.0, %v2389
      %v2391 = vpop.f32.mrf.mxu0
      %v2392 = vadd.f32 0.0, %v2391
      %2393 = vmatmul.bf16.gmra.mxu0 %v2353
      %v2394 = vpop.f32.mrf.mxu0
      %v2395 = vadd.f32 0.0, %v2394
      %v2396 = vpop.f32.mrf.mxu0
      %v2397 = vadd.f32 0.0, %v2396
      %2398 = vmatmul.bf16.gmra.mxu0 %v2356
      %v2399 = vpop.f32.mrf.mxu0
      %v2400 = vadd.f32 0.0, %v2399
      %v2401 = vpop.f32.mrf.mxu0
      %v2402 = vadd.f32 0.0, %v2401
      %2403 = vmatmul.bf16.gmra.mxu0 %v2359
      %v2404 = vpop.f32.mrf.mxu0
      %v2405 = vadd.f32 0.0, %v2404
      %v2406 = vpop.f32.mrf.mxu0
      %v2407 = vadd.f32 0.0, %v2406
      %2408 = vmatmul.bf16.gmra.mxu0 %v2362
      %v2409 = vpop.f32.mrf.mxu0
      %v2410 = vadd.f32 0.0, %v2409
      %v2411 = vpop.f32.mrf.mxu0
      %v2412 = vadd.f32 0.0, %v2411
      %2413 = vdwg.mxu0
      %2414 = vmatpush.bf16.msra.mxu0 %v2291
      %2415 = vmatpush.bf16.msra.mxu0 %v2290
      %2416 = vmatpush.bf16.msra.mxu0 %v2289
      %2417 = vmatpush.bf16.msra.mxu0 %v2288
      %2418 = vmatpush.bf16.msra.mxu0 %v2287
      %2419 = vmatpush.bf16.msra.mxu0 %v2286
      %2420 = vmatpush.bf16.msra.mxu0 %v2285
      %2421 = vmatpush.bf16.msra.mxu0 %v2284
      %2422 = vmatmul.bf16.gmra.mxu0 %v2351
      %v2423 = vpop.f32.mrf.mxu0
      %v2424 = vadd.f32 %v2390, %v2423
      %v2425 = vpop.f32.mrf.mxu0
      %v2426 = vadd.f32 %v2392, %v2425
      %2427 = vmatmul.bf16.gmra.mxu0 %v2354
      %v2428 = vpop.f32.mrf.mxu0
      %v2429 = vadd.f32 %v2395, %v2428
      %v2430 = vpop.f32.mrf.mxu0
      %v2431 = vadd.f32 %v2397, %v2430
      %2432 = vmatmul.bf16.gmra.mxu0 %v2357
      %v2433 = vpop.f32.mrf.mxu0
      %v2434 = vadd.f32 %v2400, %v2433
      %v2435 = vpop.f32.mrf.mxu0
      %v2436 = vadd.f32 %v2402, %v2435
      %2437 = vmatmul.bf16.gmra.mxu0 %v2360
      %v2438 = vpop.f32.mrf.mxu0
      %v2439 = vadd.f32 %v2405, %v2438
      %v2440 = vpop.f32.mrf.mxu0
      %v2441 = vadd.f32 %v2407, %v2440
      %2442 = vmatmul.bf16.gmra.mxu0 %v2363
      %v2443 = vpop.f32.mrf.mxu0
      %v2444 = vadd.f32 %v2410, %v2443
      %v2445 = vpop.f32.mrf.mxu0
      %v2446 = vadd.f32 %v2412, %v2445
      %2447 = vdwg.mxu0
      %2448 = vmatpush.bf16.msra.mxu0 %v2299
      %2449 = vmatpush.bf16.msra.mxu0 %v2298
      %2450 = vmatpush.bf16.msra.mxu0 %v2297
      %2451 = vmatpush.bf16.msra.mxu0 %v2296
      %2452 = vmatpush.bf16.msra.mxu0 %v2295
      %2453 = vmatpush.bf16.msra.mxu0 %v2294
      %2454 = vmatpush.bf16.msra.mxu0 %v2293
      %2455 = vmatpush.bf16.msra.mxu0 %v2292
      %2456 = vmatmul.bf16.gmra.mxu0 %v2352
      %v2457 = vpop.f32.mrf.mxu0
      %v2458 = vadd.f32 %v2424, %v2457
      %v2459 = vpop.f32.mrf.mxu0
      %v2460 = vadd.f32 %v2426, %v2459
      %2461 = vmatmul.bf16.gmra.mxu0 %v2355
      %v2462 = vpop.f32.mrf.mxu0
      %v2463 = vadd.f32 %v2429, %v2462
      %v2464 = vpop.f32.mrf.mxu0
      %v2465 = vadd.f32 %v2431, %v2464
      %2466 = vmatmul.bf16.gmra.mxu0 %v2358
      %v2467 = vpop.f32.mrf.mxu0
      %v2468 = vadd.f32 %v2434, %v2467
      %v2469 = vpop.f32.mrf.mxu0
      %v2470 = vadd.f32 %v2436, %v2469
      %2471 = vmatmul.bf16.gmra.mxu0 %v2361
      %v2472 = vpop.f32.mrf.mxu0
      %v2473 = vadd.f32 %v2439, %v2472
      %v2474 = vpop.f32.mrf.mxu0
      %v2475 = vadd.f32 %v2441, %v2474
      %2476 = vmatmul.bf16.gmra.mxu0 %v2364
      %v2477 = vpop.f32.mrf.mxu0
      %v2478 = vadd.f32 %v2444, %v2477
      %v2479 = vpop.f32.mrf.mxu0
      %v2480 = vadd.f32 %v2446, %v2479
      %2481 = vdwg.mxu0
      %2482 = vst [vmem:[%s242] sm:$0xff] %v2458
      %2483 = vst [vmem:[%s242 + $0x8] sm:$0xff] %v2460
      %2484 = vst [vmem:[%s242 + $0x10] sm:$0xff] %v2463
      %2485 = vst [vmem:[%s242 + $0x18] sm:$0xff] %v2465
      %2486 = vst [vmem:[%s242 + $0x20] sm:$0xff] %v2468
      %2487 = vst [vmem:[%s242 + $0x28] sm:$0xff] %v2470
      %2488 = vst [vmem:[%s242 + $0x30] sm:$0xff] %v2473
      %2489 = vst [vmem:[%s242 + $0x38] sm:$0xff] %v2475
      %2490 = vst [vmem:[%s242 + $0x40] sm:$0xff] %v2478
      %2491 = vst [vmem:[%s242 + $0x48] sm:$0xff] %v2480
      %s2492 = smul.u32 %s21, 128
      %s2493 = ssub.s32 16, %s2492
      %p2494 = scmp.gt.s32.totalorder %s2493, 0
      %s2495 = scalar_select %p2494, %s2493, 0
      %p2496 = scmp.lt.s32.totalorder %s2495, 128
      %s2497 = scalar_select %p2496, %s2495, 128
      %v2498 = vlaneseq
      %v2499 = vand.u32 %v2498, 127
      %v2500 = vstv %s2497
      %vm2501 = vcmp.lt.s32.totalorder %v2499, %v2500
      %v2502 = vsel %vm2501, 1, 0
      %vm2503 = vcmp.eq.s32.totalorder %v2502, 1
      %v2504 = vsel %vm2503, %v2458, 0.0
      %v2505 = vsel %vm2503, %v2460, 0.0
      %v2506 = vsel %vm2503, %v2463, 0.0
      %v2507 = vsel %vm2503, %v2465, 0.0
      %v2508 = vsel %vm2503, %v2468, 0.0
      %v2509 = vsel %vm2503, %v2470, 0.0
      %v2510 = vsel %vm2503, %v2473, 0.0
      %v2511 = vsel %vm2503, %v2475, 0.0
      %v2512 = vsel %vm2503, %v2478, 0.0
      %v2513 = vsel %vm2503, %v2480, 0.0
      %2514 = vadd.xlane.f32.xlu0 %v2504
      %v2515 = vpop.xlane.xlu0 %2514
      %2516 = vadd.xlane.f32.xlu0 %v2505
      %v2517 = vpop.xlane.xlu0 %2516
      %2518 = vadd.xlane.f32.xlu0 %v2506
      %v2519 = vpop.xlane.xlu0 %2518
      %2520 = vadd.xlane.f32.xlu0 %v2507
      %v2521 = vpop.xlane.xlu0 %2520
      %2522 = vadd.xlane.f32.xlu0 %v2508
      %v2523 = vpop.xlane.xlu0 %2522
      %2524 = vadd.xlane.f32.xlu0 %v2509
      %v2525 = vpop.xlane.xlu0 %2524
      %2526 = vadd.xlane.f32.xlu0 %v2510
      %v2527 = vpop.xlane.xlu0 %2526
      %2528 = vadd.xlane.f32.xlu0 %v2511
      %v2529 = vpop.xlane.xlu0 %2528
      %2530 = vadd.xlane.f32.xlu0 %v2512
      %v2531 = vpop.xlane.xlu0 %2530
      %2532 = vadd.xlane.f32.xlu0 %v2513
      %v2533 = vpop.xlane.xlu0 %2532
      %v2534 = vmul.f32 %v2504, %v2504
      %v2535 = vmul.f32 %v2505, %v2505
      %v2536 = vmul.f32 %v2506, %v2506
      %v2537 = vmul.f32 %v2507, %v2507
      %v2538 = vmul.f32 %v2508, %v2508
      %v2539 = vmul.f32 %v2509, %v2509
      %v2540 = vmul.f32 %v2510, %v2510
      %v2541 = vmul.f32 %v2511, %v2511
      %v2542 = vmul.f32 %v2512, %v2512
      %v2543 = vmul.f32 %v2513, %v2513
      %2544 = vadd.xlane.f32.xlu0 %v2534
      %v2545 = vpop.xlane.xlu0 %2544
      %2546 = vadd.xlane.f32.xlu0 %v2535
      %v2547 = vpop.xlane.xlu0 %2546
      %2548 = vadd.xlane.f32.xlu0 %v2536
      %v2549 = vpop.xlane.xlu0 %2548
      %2550 = vadd.xlane.f32.xlu0 %v2537
      %v2551 = vpop.xlane.xlu0 %2550
      %2552 = vadd.xlane.f32.xlu0 %v2538
      %v2553 = vpop.xlane.xlu0 %2552
      %2554 = vadd.xlane.f32.xlu0 %v2539
      %v2555 = vpop.xlane.xlu0 %2554
      %2556 = vadd.xlane.f32.xlu0 %v2540
      %v2557 = vpop.xlane.xlu0 %2556
      %2558 = vadd.xlane.f32.xlu0 %v2541
      %v2559 = vpop.xlane.xlu0 %2558
      %2560 = vadd.xlane.f32.xlu0 %v2542
      %v2561 = vpop.xlane.xlu0 %2560
      %2562 = vadd.xlane.f32.xlu0 %v2543
      %v2563 = vpop.xlane.xlu0 %2562
      %vm2564 = vcmask 7168
      %v2565 = vsel %vm2564, %v2515, %v2545
      %v2566 = vsel %vm2564, %v2517, %v2547
      %v2567 = vsel %vm2564, %v2519, %v2549
      %v2568 = vsel %vm2564, %v2521, %v2551
      %v2569 = vsel %vm2564, %v2523, %v2553
      %v2570 = vsel %vm2564, %v2525, %v2555
      %v2571 = vsel %vm2564, %v2527, %v2557
      %v2572 = vsel %vm2564, %v2529, %v2559
      %v2573 = vsel %vm2564, %v2531, %v2561
      %v2574 = vsel %vm2564, %v2533, %v2563
      %vm2575 = vcmask 15360
      %2576 = vst.msk [vmem:[%s251] sm:$0xff] %vm2575, %v2565
      %2577 = vst.msk [vmem:[%s251 + $0x8] sm:$0xff] %vm2575, %v2566
      %2578 = vst.msk [vmem:[%s251 + $0x10] sm:$0xff] %vm2575, %v2567
      %2579 = vst.msk [vmem:[%s251 + $0x18] sm:$0xff] %vm2575, %v2568
      %2580 = vst.msk [vmem:[%s251 + $0x20] sm:$0xff] %vm2575, %v2569
      %2581 = vst.msk [vmem:[%s251 + $0x28] sm:$0xff] %vm2575, %v2570
      %2582 = vst.msk [vmem:[%s251 + $0x30] sm:$0xff] %vm2575, %v2571
      %2583 = vst.msk [vmem:[%s251 + $0x38] sm:$0xff] %vm2575, %v2572
      %2584 = vst.msk [vmem:[%s251 + $0x40] sm:$0xff] %vm2575, %v2573
      %2585 = vst.msk [vmem:[%s251 + $0x48] sm:$0xff] %vm2575, %v2574
      %p2586 = scmp.lt.s32.totalorder %s20, 1
      %s2587 = scalar_select %p2586, %s20, 1
      %p2588 = scmp.lt.s32.totalorder %s21, 0
      %s2589 = scalar_select %p2588, %s21, 0
      %s2590 = smul.addr %s2587, 10
      %s2591 = sadd.s32 %s2589, %s2590
      %s2592 = smul.addr %s2591, 8
      %s2593 = scalar_lea.vmem %s3, %s2592
      %p2594 = scmp.lt.s32.totalorder %s20, 1
      %s2595 = scalar_select %p2594, %s20, 1
      %p2596 = scmp.lt.s32.totalorder %s21, 0
      %s2597 = scalar_select %p2596, %s21, 0
      %s2598 = smul.addr %s2597, 10
      %s2599 = smul.addr %s2595, 10
      %s2600 = sadd.s32 %s2598, %s2599
      %s2601 = smul.addr %s2600, 8
      %s2602 = scalar_lea.vmem %s4, %s2601
      // Predicated region
      $region33: #{mel_spectrogram_forward.1} parent=31 // pred_check
        %p2603 = pneg %p118
      $region34: #{mel_spectrogram_forward.1} parent=31 // pred_check_branch
        %2605 = sbr.rel (%p2603) target = $region36
      $region35: #{mel_spectrogram_forward.1} parent=31 // pred_region
        _
      $region36: #{mel_spectrogram_forward.1} parent=31 // pred_fallthru
        _
      // Predicated region
      $region37: #{mel_spectrogram_forward.1} parent=31 // pred_check
        %p2606 = pneg %p146
      $region38: #{mel_spectrogram_forward.1} parent=31 // pred_check_branch
        %2608 = sbr.rel (%p2606) target = $region40
      $region39: #{mel_spectrogram_forward.1} parent=31 // pred_region
        _
      $region40: #{mel_spectrogram_forward.1} parent=31 // pred_fallthru
        _
    $region32: #{mel_spectrogram_forward.1} parent=5 // pred_fallthru
      _
    %p2609 = scmp.le.s32.totalorder 2, %s11
    // Predicated region
    $region41: #{mel_spectrogram_forward.1} parent=5 // pred_check
      %p2610 = pneg %p2609
    $region42: #{mel_spectrogram_forward.1} parent=5 // pred_check_branch
      %2612 = sbr.rel (%p2610) target = $region44
    $region43: #{mel_spectrogram_forward.1} parent=5 // pred_region
      %s2613 = ssub.s32 %s11, 2
      // Predicated region
      $region45: #{mel_spectrogram_forward.1} parent=43 // pred_check
        %p2614 = pneg %p124
      $region46: #{mel_spectrogram_forward.1} parent=43 // pred_check_branch
        %2616 = sbr.rel (%p2614) target = $region48
      $region47: #{mel_spectrogram_forward.1} parent=43 // pred_region
        %p2617 = scmp.lt.s32.totalorder %s22, 1
        %s2618 = scalar_select %p2617, %s22, 1
        %p2619 = scmp.lt.s32.totalorder %s23, 0
        %s2620 = scalar_select %p2619, %s23, 0
        %s2621 = smul.addr %s2618, 10
        %s2622 = sadd.s32 %s2620, %s2621
        %s2623 = smul.addr %s2622, 8
        %s2624 = scalar_lea.vmem %s3, %s2623
      $region48: #{mel_spectrogram_forward.1} parent=43 // pred_fallthru
        _
      // Predicated region
      $region49: #{mel_spectrogram_forward.1} parent=43 // pred_check
        %p2625 = pneg %p152
      $region50: #{mel_spectrogram_forward.1} parent=43 // pred_check_branch
        %2627 = sbr.rel (%p2625) target = $region52
      $region51: #{mel_spectrogram_forward.1} parent=43 // pred_region
        %p2628 = scmp.lt.s32.totalorder %s22, 1
        %s2629 = scalar_select %p2628, %s22, 1
        %p2630 = scmp.lt.s32.totalorder %s23, 0
        %s2631 = scalar_select %p2630, %s23, 0
        %s2632 = smul.addr %s2631, 10
        %s2633 = smul.addr %s2629, 10
        %s2634 = sadd.s32 %s2632, %s2633
        %s2635 = smul.addr %s2634, 8
        %s2636 = scalar_lea.vmem %s4, %s2635
      $region52: #{mel_spectrogram_forward.1} parent=43 // pred_fallthru
        _
    $region44: #{mel_spectrogram_forward.1} parent=5 // pred_fallthru
      _
  $region6: #{mel_spectrogram_forward.1} parent=0 // loop_footer
    %s15 = sadd.s32 1, %s11
  $region7: #{mel_spectrogram_forward.1} parent=0 // loop_footer_branch
    %10 = sbr.rel target = $region3
  $region8: #{mel_spectrogram_forward.1} parent=0 // loop_exit
    _

</llo_original>
